<compile_context>
chip_gen: v6e
topology: v6e:2x2x1
jax: 0.10.0
libtpu: 0.0.40
codegen_flags: <defaults>
</compile_context>

<pallas_src>
import functools

import jax
import jax.numpy as jnp
from jax.experimental import pallas as pl
from jax.experimental.pallas import tpu as pltpu

EPS = 1e-5
LEAKY_SLOPE = 0.2


# ----------------------------- Pallas kernels -----------------------------

def conv_stats_kernel(w_ref, p_ref, y_ref, sum_ref, sq_ref):
    """One MXU matmul (cout, K) @ (K, TM), bf16 in / f32 out, plus per-channel
    sum and sum-of-squares accumulated across the M grid for train-mode BN."""
    y = jnp.dot(w_ref[...], p_ref[...], preferred_element_type=jnp.float32)  # (cout, TM) f32
    y_ref[...] = y

    @pl.when(pl.program_id(0) == 0)
    def _():
        sum_ref[...] = jnp.zeros_like(sum_ref)
        sq_ref[...] = jnp.zeros_like(sq_ref)

    sum_ref[...] += jnp.sum(y, axis=1, keepdims=True)        # (cout, 1)
    sq_ref[...] += jnp.sum(y * y, axis=1, keepdims=True)     # (cout, 1)


def bn_act_kernel(y_ref, scale_ref, shift_ref, o_ref, *, act):
    """Apply folded BatchNorm (y*scale + shift) + optional activation, tiled over M."""
    t = y_ref[...] * scale_ref[...] + shift_ref[...]
    if act == "relu":
        t = jnp.maximum(t, 0.0)
    elif act == "leaky":
        t = jnp.where(t > 0, t, LEAKY_SLOPE * t)
    o_ref[...] = t.astype(o_ref.dtype)


def bn_add_leaky_kernel(y_ref, scale_ref, shift_ref, skip_ref, o_ref):
    """Last residual layer: folded BN + residual add + LeakyReLU fused in one epilogue."""
    t = y_ref[...] * scale_ref[...] + shift_ref[...]
    s = t + skip_ref[...].astype(jnp.float32)
    o_ref[...] = jnp.where(s > 0, s, LEAKY_SLOPE * s).astype(o_ref.dtype)


# ----------------------------- pallas_call wrappers -----------------------------

def conv_stats(w_ck, p_km, tm):
    cout, k = w_ck.shape
    _, mp = p_km.shape
    return pl.pallas_call(
        conv_stats_kernel,
        out_shape=(jax.ShapeDtypeStruct((cout, mp), jnp.float32),
                   jax.ShapeDtypeStruct((cout, 1), jnp.float32),
                   jax.ShapeDtypeStruct((cout, 1), jnp.float32)),
        grid=(mp // tm,),
        in_specs=[pl.BlockSpec((cout, k), lambda j: (0, 0)),   # weights stay resident
                  pl.BlockSpec((k, tm), lambda j: (0, j))],    # patch tile, lane-dense
        out_specs=(pl.BlockSpec((cout, tm), lambda j: (0, j)),
                   pl.BlockSpec((cout, 1), lambda j: (0, 0)),  # resident accumulators
                   pl.BlockSpec((cout, 1), lambda j: (0, 0))),
        compiler_params=pltpu.CompilerParams(dimension_semantics=("arbitrary",)),
    )(w_ck, p_km)


def bn_act(y_cm, scale, shift, tm, act, out_dtype):
    cout, mp = y_cm.shape
    return pl.pallas_call(
        functools.partial(bn_act_kernel, act=act),
        out_shape=jax.ShapeDtypeStruct((cout, mp), out_dtype),
        grid=(mp // tm,),
        in_specs=[pl.BlockSpec((cout, tm), lambda j: (0, j)),
                  pl.BlockSpec((cout, 1), lambda j: (0, 0)),
                  pl.BlockSpec((cout, 1), lambda j: (0, 0))],
        out_specs=pl.BlockSpec((cout, tm), lambda j: (0, j)),
        compiler_params=pltpu.CompilerParams(dimension_semantics=("parallel",)),
    )(y_cm, scale, shift)


def bn_add_leaky(y_cm, scale, shift, skip_cm, tm, out_dtype):
    cout, mp = y_cm.shape
    return pl.pallas_call(
        bn_add_leaky_kernel,
        out_shape=jax.ShapeDtypeStruct((cout, mp), out_dtype),
        grid=(mp // tm,),
        in_specs=[pl.BlockSpec((cout, tm), lambda j: (0, j)),
                  pl.BlockSpec((cout, 1), lambda j: (0, 0)),
                  pl.BlockSpec((cout, 1), lambda j: (0, 0)),
                  pl.BlockSpec((cout, tm), lambda j: (0, j))],
        out_specs=pl.BlockSpec((cout, tm), lambda j: (0, j)),
        compiler_params=pltpu.CompilerParams(dimension_semantics=("parallel",)),
    )(y_cm, scale, shift, skip_cm)


# ----------------------------- layout / BN helpers -----------------------------

def _tile_m(m):
    """Largest lane-tile (multiple of 128) that divides m with a few grid steps."""
    for tm in (1024, 512, 256, 128):
        if m % tm == 0 and m // tm >= 4:
            return tm
    for tm in (1024, 512, 256, 128):
        if m % tm == 0:
            return tm
    return 128  # m will be zero-padded up to a multiple of 128


def _pad_m(a_2d, mp):
    m = a_2d.shape[1]
    if mp == m:
        return a_2d
    return jnp.pad(a_2d, ((0, 0), (0, mp - m)))   # zero cols: no effect on sums/sumsq


def bn_coeffs(s, sq, m_true, g, beta):
    """Fold train-mode BN (biased var) + gamma/beta into a single scale/shift per channel."""
    mean = s[:, 0] / m_true
    var = jnp.maximum(sq[:, 0] / m_true - mean * mean, 0.0)
    scale = g * jax.lax.rsqrt(var + EPS)
    shift = beta - mean * scale
    return (scale.reshape(-1, 1).astype(jnp.float32),
            shift.reshape(-1, 1).astype(jnp.float32))


def _down_patches(x_ncdhw):
    """k=2, s=2 conv patches (stride==kernel => pure reshape), channel-major: (cin*8, M)."""
    n, cin, d, h, w = x_ncdhw.shape
    do, ho, wo = d // 2, h // 2, w // 2
    xr = x_ncdhw.reshape(n, cin, do, 2, ho, 2, wo, 2)
    p = jnp.transpose(xr, (1, 3, 5, 7, 0, 2, 4, 6))           # (cin, kd, kh, kw, n, do, ho, wo)
    return p.reshape(cin * 8, n * do * ho * wo)


def _im2col3(a_cm, n, d, h, w, m_true):
    """3x3x3 / pad=1 im2col of a channel-major (C, M) activation -> (C*27, M)."""
    c = a_cm.shape[0]
    a = a_cm[:, :m_true].reshape(c, n, d, h, w)
    ap = jnp.pad(a, ((0, 0), (0, 0), (1, 1), (1, 1), (1, 1)))
    cols = [ap[:, :, kd:kd + d, kh:kh + h, kw:kw + w]
            for kd in range(3) for kh in range(3) for kw in range(3)]
    pk = jnp.stack(cols, axis=1)                               # (c, 27, n, d, h, w)
    return pk.reshape(c * 27, m_true)


# ----------------------------- parameters -----------------------------

def init_params(key, in_channels, nums):
    co = 2 * in_channels
    keys = jax.random.split(key, 4 + 4 * nums)
    params = {
        "down_w": 0.1 * jax.random.normal(keys[0], (co, in_channels, 2, 2, 2), jnp.float32),
        "down_b": 0.1 * jax.random.normal(keys[1], (co,), jnp.float32),
        "bn1_g": 1.0 + 0.1 * jax.random.normal(keys[2], (co,), jnp.float32),
        "bn1_b": 0.1 * jax.random.normal(keys[3], (co,), jnp.float32),
    }
    for i in range(nums):
        k = keys[4 + 4 * i: 4 + 4 * (i + 1)]
        params[f"res{i}_w"] = 0.05 * jax.random.normal(k[0], (co, co, 3, 3, 3), jnp.float32)
        params[f"res{i}_b"] = 0.1 * jax.random.normal(k[1], (co,), jnp.float32)
        params[f"res{i}_g"] = 1.0 + 0.1 * jax.random.normal(k[2], (co,), jnp.float32)
        params[f"res{i}_beta"] = 0.1 * jax.random.normal(k[3], (co,), jnp.float32)
    return params


def prepare_params(params, nums):
    """One-time weight layout prep (hoisted out of the forward pass).

    Conv biases are intentionally dropped: under train-mode BatchNorm the bias is
    cancelled exactly by the mean subtraction."""
    co, cin = params["down_w"].shape[:2]
    prep = {
        "down_w": params["down_w"].reshape(co, cin * 8).astype(jnp.bfloat16),
        "bn1_g": params["bn1_g"].astype(jnp.float32),
        "bn1_b": params["bn1_b"].astype(jnp.float32),
    }
    for i in range(nums):
        prep[f"res{i}_w"] = params[f"res{i}_w"].reshape(co, co * 27).astype(jnp.bfloat16)
        prep[f"res{i}_g"] = params[f"res{i}_g"].astype(jnp.float32)
        prep[f"res{i}_beta"] = params[f"res{i}_beta"].astype(jnp.float32)
    return prep


# ----------------------------- forward -----------------------------

def down_transition_forward(x_ncdhw, prep, nums):
    n, cin, d, h, w = x_ncdhw.shape
    co = 2 * cin
    do, ho, wo = d // 2, h // 2, w // 2
    m = n * do * ho * wo
    tm = _tile_m(m)
    mp = -(-m // tm) * tm

    # ---- self.down (k=2, s=2) + bn1 (train-mode) + ReLU ----
    p = _pad_m(_down_patches(x_ncdhw).astype(jnp.bfloat16), mp)          # (8*cin, Mp) bf16
    y_pre, s, sq = conv_stats(prep["down_w"], p, tm)                     # (co, Mp) f32
    scale, shift = bn_coeffs(s, sq, m, prep["bn1_g"], prep["bn1_b"])
    y = bn_act(y_pre, scale, shift, tm, act="relu", out_dtype=jnp.bfloat16)   # skip tensor

    # ---- ResidualBlock: nums x (3x3x3 conv + BN [+LeakyReLU]), then fused add + LeakyReLU ----
    out = y
    for i in range(nums):
        patches = _pad_m(_im2col3(out, n, do, ho, wo, m), mp)            # (27*co, Mp) bf16
        z_pre, s, sq = conv_stats(prep[f"res{i}_w"], patches, tm)
        scale, shift = bn_coeffs(s, sq, m, prep[f"res{i}_g"], prep[f"res{i}_beta"])
        if i != nums - 1:
            out = bn_act(z_pre, scale, shift, tm, act="leaky", out_dtype=jnp.bfloat16)
        else:
            out = bn_add_leaky(z_pre, scale, shift, y, tm, out_dtype=jnp.float32)

    out = out[:, :m].reshape(co, n, do, ho, wo)
    return jnp.transpose(out, (1, 0, 2, 3, 4))                            # back to NCDHW


# ----------------------------- pure-JAX reference -----------------------------

def _conv3d_ref(x, w, b, stride, pad):
    out = jax.lax.conv_general_dilated(
        x, w, window_strides=(stride,) * 3, padding=[(pad, pad)] * 3,
        dimension_numbers=("NCDHW", "OIDHW", "NCDHW"))
    return out + b.reshape(1, -1, 1, 1, 1)


def _bn_ref(x, g, beta):
    mean = jnp.mean(x, axis=(0, 2, 3, 4), keepdims=True)
    var = jnp.mean((x - mean) ** 2, axis=(0, 2, 3, 4), keepdims=True)
    xhat = (x - mean) / jnp.sqrt(var + EPS)
    return g.reshape(1, -1, 1, 1, 1) * xhat + beta.reshape(1, -1, 1, 1, 1)


def _leaky_ref(x):
    return jnp.where(x > 0, x, LEAKY_SLOPE * x)


def down_transition_ref(x, params, nums):
    y = jnp.maximum(_bn_ref(_conv3d_ref(x, params["down_w"], params["down_b"], 2, 0),
                            params["bn1_g"], params["bn1_b"]), 0.0)
    out = y
    for i in range(nums):
        out = _bn_ref(_conv3d_ref(out, params[f"res{i}_w"], params[f"res{i}_b"], 1, 1),
                      params[f"res{i}_g"], params[f"res{i}_beta"])
        if i != nums - 1:
            out = _leaky_ref(out)
    return _leaky_ref(out + y)


# ----------------------------- main -----------------------------

if __name__ == "__main__":
    key = jax.random.PRNGKey(0)
    kx, kp = jax.random.split(key)
    in_channels, nums = 4, 2
    x = jax.random.normal(kx, (2, in_channels, 16, 16, 16), jnp.float32)  # NCDHW, like PyTorch
    params = init_params(kp, in_channels, nums)
    prep = prepare_params(params, nums)   # one-time weight layout prep (not per-forward)

    fwd = jax.jit(functools.partial(down_transition_forward, nums=nums))
    out = jax.block_until_ready(fwd(x, prep))
    ref = jax.block_until_ready(down_transition_ref(x, params, nums))

    assert out.shape == (2, 2 * in_channels, 8, 8, 8), out.shape
    max_diff = float(jnp.max(jnp.abs(out - ref)))
    assert max_diff < 5e-2, f"max abs diff vs reference too large: {max_diff}"
    print("KERNEL_OK")
</pallas_src>

<mosaic_0001>
module attributes {stable_mosaic.version = 11 : i64} {
  func.func @conv_stats_kernel(%arg0: i32, %arg1: memref<8x32xbf16, #tpu.memory_space<vmem>>, %arg2: memref<32x256xbf16, #tpu.memory_space<vmem>>, %arg3: memref<8x256xf32, #tpu.memory_space<vmem>>, %arg4: memref<8x1xf32, #tpu.memory_space<vmem>>, %arg5: memref<8x1xf32, #tpu.memory_space<vmem>>) attributes {dimension_semantics = [#tpu.dimension_semantics<arbitrary>], iteration_bounds = array<i64: 4>, scalar_prefetch = 0 : i64, scratch_operands = 0 : i64, tpu.core_type = #tpu.core_type<tc>, window_params = [{pipeline_mode = #tpu.pipeline_mode<synchronous>, transform_indices = @transform_0, window_bounds = array<i64: 8, 32>}, {transform_indices = @transform_1, window_bounds = array<i64: 32, 256>}, {transform_indices = @transform_2, window_bounds = array<i64: 8, 256>}, {pipeline_mode = #tpu.pipeline_mode<synchronous>, transform_indices = @transform_3, window_bounds = array<i64: 8, 1>}, {pipeline_mode = #tpu.pipeline_mode<synchronous>, transform_indices = @transform_4, window_bounds = array<i64: 8, 1>}]} {
    %c0 = arith.constant 0 : index
    %c0_0 = arith.constant 0 : index
    %0 = vector.load %arg1[%c0, %c0_0] : memref<8x32xbf16, #tpu.memory_space<vmem>>, vector<8x32xbf16>
    %c0_1 = arith.constant 0 : index
    %c0_2 = arith.constant 0 : index
    %1 = vector.load %arg2[%c0_1, %c0_2] : memref<32x256xbf16, #tpu.memory_space<vmem>>, vector<32x256xbf16>
    %cst = arith.constant dense<0.000000e+00> : vector<8x256xf32>
    %2 = tpu.matmul %0, %1, %cst {dimension_numbers = #tpu.dot_dimension_numbers<[1], [0], [0], [1], [0, 0, 1, 1], [], []>} : vector<8x32xbf16>, vector<32x256xbf16>, vector<8x256xf32> -> vector<8x256xf32>
    %c0_3 = arith.constant 0 : index
    %c0_4 = arith.constant 0 : index
    %3 = vector.load %arg3[%c0_3, %c0_4] : memref<8x256xf32, #tpu.memory_space<vmem>>, vector<8x256xf32>
    tpu.vector_store %arg3[%c0_3, %c0_4], %2 {strides = array<i32>} : memref<8x256xf32, #tpu.memory_space<vmem>>, vector<8x256xf32>,
    %c0_i32 = arith.constant 0 : i32
    %4 = arith.cmpi eq, %arg0, %c0_i32 : i32
    %5 = arith.extui %4 : i1 to i32
    %c0_i32_5 = arith.constant 0 : i32
    %6 = arith.cmpi ne, %5, %c0_i32_5 : i32
    scf.if %6 {
      %cst_16 = arith.constant 0.000000e+00 : f32
      %18 = vector.broadcast %cst_16 : f32 to vector<8x1xf32>
      %c0_17 = arith.constant 0 : index
      %c0_18 = arith.constant 0 : index
      %19 = vector.load %arg4[%c0_17, %c0_18] : memref<8x1xf32, #tpu.memory_space<vmem>>, vector<8x1xf32>
      tpu.vector_store %arg4[%c0_17, %c0_18], %18 {strides = array<i32>} : memref<8x1xf32, #tpu.memory_space<vmem>>, vector<8x1xf32>,
      %cst_19 = arith.constant 0.000000e+00 : f32
      %20 = vector.broadcast %cst_19 : f32 to vector<8x1xf32>
      %c0_20 = arith.constant 0 : index
      %c0_21 = arith.constant 0 : index
      %21 = vector.load %arg5[%c0_20, %c0_21] : memref<8x1xf32, #tpu.memory_space<vmem>>, vector<8x1xf32>
      tpu.vector_store %arg5[%c0_20, %c0_21], %20 {strides = array<i32>} : memref<8x1xf32, #tpu.memory_space<vmem>>, vector<8x1xf32>,
    } else {
    }
    %c0_6 = arith.constant 0 : index
    %c0_7 = arith.constant 0 : index
    %7 = vector.load %arg4[%c0_6, %c0_7] : memref<8x1xf32, #tpu.memory_space<vmem>>, vector<8x1xf32>
    %cst_8 = arith.constant dense<0.000000e+00> : vector<8xf32>
    %8 = vector.multi_reduction <add>, %2, %cst_8 [1] : vector<8x256xf32> to vector<8xf32>
    %9 = vector.shape_cast %8 : vector<8xf32> to vector<8x1xf32>
    %10 = arith.addf %7, %9 : vector<8x1xf32>
    %c0_9 = arith.constant 0 : index
    %c0_10 = arith.constant 0 : index
    %11 = vector.load %arg4[%c0_9, %c0_10] : memref<8x1xf32, #tpu.memory_space<vmem>>, vector<8x1xf32>
    tpu.vector_store %arg4[%c0_9, %c0_10], %10 {strides = array<i32>} : memref<8x1xf32, #tpu.memory_space<vmem>>, vector<8x1xf32>,
    %c0_11 = arith.constant 0 : index
    %c0_12 = arith.constant 0 : index
    %12 = vector.load %arg5[%c0_11, %c0_12] : memref<8x1xf32, #tpu.memory_space<vmem>>, vector<8x1xf32>
    %13 = arith.mulf %2, %2 : vector<8x256xf32>
    %cst_13 = arith.constant dense<0.000000e+00> : vector<8xf32>
    %14 = vector.multi_reduction <add>, %13, %cst_13 [1] : vector<8x256xf32> to vector<8xf32>
    %15 = vector.shape_cast %14 : vector<8xf32> to vector<8x1xf32>
    %16 = arith.addf %12, %15 : vector<8x1xf32>
    %c0_14 = arith.constant 0 : index
    %c0_15 = arith.constant 0 : index
    %17 = vector.load %arg5[%c0_14, %c0_15] : memref<8x1xf32, #tpu.memory_space<vmem>>, vector<8x1xf32>
    tpu.vector_store %arg5[%c0_14, %c0_15], %16 {strides = array<i32>} : memref<8x1xf32, #tpu.memory_space<vmem>>, vector<8x1xf32>,
    return
  }
  func.func @transform_0(%arg0: i32) -> (i32, i32) {
    %c0_i32 = arith.constant 0 : i32
    %c0_i32_0 = arith.constant 0 : i32
    %c0_i32_1 = arith.constant 0 : i32
    return %c0_i32, %c0_i32_0 : i32, i32
  }
  func.func @transform_1(%arg0: i32) -> (i32, i32) {
    %c0_i32 = arith.constant 0 : i32
    %c0_i32_0 = arith.constant 0 : i32
    return %c0_i32, %arg0 : i32, i32
  }
  func.func @transform_2(%arg0: i32) -> (i32, i32) {
    %c0_i32 = arith.constant 0 : i32
    %c0_i32_0 = arith.constant 0 : i32
    return %c0_i32, %arg0 : i32, i32
  }
  func.func @transform_3(%arg0: i32) -> (i32, i32) {
    %c0_i32 = arith.constant 0 : i32
    %c0_i32_0 = arith.constant 0 : i32
    %c0_i32_1 = arith.constant 0 : i32
    return %c0_i32, %c0_i32_0 : i32, i32
  }
  func.func @transform_4(%arg0: i32) -> (i32, i32) {
    %c0_i32 = arith.constant 0 : i32
    %c0_i32_0 = arith.constant 0 : i32
    %c0_i32_1 = arith.constant 0 : i32
    return %c0_i32, %c0_i32_0 : i32, i32
  }
}

module attributes {stable_mosaic.version = 11 : i64} {
  func.func @bn_act_kernel(%arg0: i32, %arg1: memref<8x256xf32, #tpu.memory_space<vmem>>, %arg2: memref<8x1xf32, #tpu.memory_space<vmem>>, %arg3: memref<8x1xf32, #tpu.memory_space<vmem>>, %arg4: memref<8x256xbf16, #tpu.memory_space<vmem>>) attributes {dimension_semantics = [#tpu.dimension_semantics<parallel>], iteration_bounds = array<i64: 4>, scalar_prefetch = 0 : i64, scratch_operands = 0 : i64, tpu.core_type = #tpu.core_type<tc>, window_params = [{transform_indices = @transform_0, window_bounds = array<i64: 8, 256>}, {pipeline_mode = #tpu.pipeline_mode<synchronous>, transform_indices = @transform_1, window_bounds = array<i64: 8, 1>}, {pipeline_mode = #tpu.pipeline_mode<synchronous>, transform_indices = @transform_2, window_bounds = array<i64: 8, 1>}, {transform_indices = @transform_3, window_bounds = array<i64: 8, 256>}]} {
    %c0 = arith.constant 0 : index
    %c0_0 = arith.constant 0 : index
    %0 = vector.load %arg1[%c0, %c0_0] : memref<8x256xf32, #tpu.memory_space<vmem>>, vector<8x256xf32>
    %c0_1 = arith.constant 0 : index
    %c0_2 = arith.constant 0 : index
    %1 = vector.load %arg2[%c0_1, %c0_2] : memref<8x1xf32, #tpu.memory_space<vmem>>, vector<8x1xf32>
    %2 = vector.broadcast %1 : vector<8x1xf32> to vector<8x256xf32>
    %3 = arith.mulf %0, %2 : vector<8x256xf32>
    %c0_3 = arith.constant 0 : index
    %c0_4 = arith.constant 0 : index
    %4 = vector.load %arg3[%c0_3, %c0_4] : memref<8x1xf32, #tpu.memory_space<vmem>>, vector<8x1xf32>
    %5 = vector.broadcast %4 : vector<8x1xf32> to vector<8x256xf32>
    %6 = arith.addf %3, %5 : vector<8x256xf32>
    %cst = arith.constant 0.000000e+00 : f32
    %7 = vector.broadcast %cst : f32 to vector<8x256xf32>
    %8 = arith.maximumf %6, %7 : vector<8x256xf32>
    %9 = arith.truncf %8 : vector<8x256xf32> to vector<8x256xbf16>
    %c0_5 = arith.constant 0 : index
    %c0_6 = arith.constant 0 : index
    %10 = vector.load %arg4[%c0_5, %c0_6] : memref<8x256xbf16, #tpu.memory_space<vmem>>, vector<8x256xbf16>
    tpu.vector_store %arg4[%c0_5, %c0_6], %9 {strides = array<i32>} : memref<8x256xbf16, #tpu.memory_space<vmem>>, vector<8x256xbf16>,
    return
  }
  func.func @transform_0(%arg0: i32) -> (i32, i32) {
    %c0_i32 = arith.constant 0 : i32
    %c0_i32_0 = arith.constant 0 : i32
    return %c0_i32, %arg0 : i32, i32
  }
  func.func @transform_1(%arg0: i32) -> (i32, i32) {
    %c0_i32 = arith.constant 0 : i32
    %c0_i32_0 = arith.constant 0 : i32
    %c0_i32_1 = arith.constant 0 : i32
    return %c0_i32, %c0_i32_0 : i32, i32
  }
  func.func @transform_2(%arg0: i32) -> (i32, i32) {
    %c0_i32 = arith.constant 0 : i32
    %c0_i32_0 = arith.constant 0 : i32
    %c0_i32_1 = arith.constant 0 : i32
    return %c0_i32, %c0_i32_0 : i32, i32
  }
  func.func @transform_3(%arg0: i32) -> (i32, i32) {
    %c0_i32 = arith.constant 0 : i32
    %c0_i32_0 = arith.constant 0 : i32
    return %c0_i32, %arg0 : i32, i32
  }
}

module attributes {stable_mosaic.version = 11 : i64} {
  func.func @conv_stats_kernel(%arg0: i32, %arg1: memref<8x216xbf16, #tpu.memory_space<vmem>>, %arg2: memref<216x256xbf16, #tpu.memory_space<vmem>>, %arg3: memref<8x256xf32, #tpu.memory_space<vmem>>, %arg4: memref<8x1xf32, #tpu.memory_space<vmem>>, %arg5: memref<8x1xf32, #tpu.memory_space<vmem>>) attributes {dimension_semantics = [#tpu.dimension_semantics<arbitrary>], iteration_bounds = array<i64: 4>, scalar_prefetch = 0 : i64, scratch_operands = 0 : i64, tpu.core_type = #tpu.core_type<tc>, window_params = [{pipeline_mode = #tpu.pipeline_mode<synchronous>, transform_indices = @transform_0, window_bounds = array<i64: 8, 216>}, {transform_indices = @transform_1, window_bounds = array<i64: 216, 256>}, {transform_indices = @transform_2, window_bounds = array<i64: 8, 256>}, {pipeline_mode = #tpu.pipeline_mode<synchronous>, transform_indices = @transform_3, window_bounds = array<i64: 8, 1>}, {pipeline_mode = #tpu.pipeline_mode<synchronous>, transform_indices = @transform_4, window_bounds = array<i64: 8, 1>}]} {
    %c0 = arith.constant 0 : index
    %c0_0 = arith.constant 0 : index
    %0 = vector.load %arg1[%c0, %c0_0] : memref<8x216xbf16, #tpu.memory_space<vmem>>, vector<8x216xbf16>
    %c0_1 = arith.constant 0 : index
    %c0_2 = arith.constant 0 : index
    %1 = vector.load %arg2[%c0_1, %c0_2] : memref<216x256xbf16, #tpu.memory_space<vmem>>, vector<216x256xbf16>
    %cst = arith.constant dense<0.000000e+00> : vector<8x256xf32>
    %2 = tpu.matmul %0, %1, %cst {dimension_numbers = #tpu.dot_dimension_numbers<[1], [0], [0], [1], [0, 0, 1, 1], [], []>} : vector<8x216xbf16>, vector<216x256xbf16>, vector<8x256xf32> -> vector<8x256xf32>
    %c0_3 = arith.constant 0 : index
    %c0_4 = arith.constant 0 : index
    %3 = vector.load %arg3[%c0_3, %c0_4] : memref<8x256xf32, #tpu.memory_space<vmem>>, vector<8x256xf32>
    tpu.vector_store %arg3[%c0_3, %c0_4], %2 {strides = array<i32>} : memref<8x256xf32, #tpu.memory_space<vmem>>, vector<8x256xf32>,
    %c0_i32 = arith.constant 0 : i32
    %4 = arith.cmpi eq, %arg0, %c0_i32 : i32
    %5 = arith.extui %4 : i1 to i32
    %c0_i32_5 = arith.constant 0 : i32
    %6 = arith.cmpi ne, %5, %c0_i32_5 : i32
    scf.if %6 {
      %cst_16 = arith.constant 0.000000e+00 : f32
      %18 = vector.broadcast %cst_16 : f32 to vector<8x1xf32>
      %c0_17 = arith.constant 0 : index
      %c0_18 = arith.constant 0 : index
      %19 = vector.load %arg4[%c0_17, %c0_18] : memref<8x1xf32, #tpu.memory_space<vmem>>, vector<8x1xf32>
      tpu.vector_store %arg4[%c0_17, %c0_18], %18 {strides = array<i32>} : memref<8x1xf32, #tpu.memory_space<vmem>>, vector<8x1xf32>,
      %cst_19 = arith.constant 0.000000e+00 : f32
      %20 = vector.broadcast %cst_19 : f32 to vector<8x1xf32>
      %c0_20 = arith.constant 0 : index
      %c0_21 = arith.constant 0 : index
      %21 = vector.load %arg5[%c0_20, %c0_21] : memref<8x1xf32, #tpu.memory_space<vmem>>, vector<8x1xf32>
      tpu.vector_store %arg5[%c0_20, %c0_21], %20 {strides = array<i32>} : memref<8x1xf32, #tpu.memory_space<vmem>>, vector<8x1xf32>,
    } else {
    }
    %c0_6 = arith.constant 0 : index
    %c0_7 = arith.constant 0 : index
    %7 = vector.load %arg4[%c0_6, %c0_7] : memref<8x1xf32, #tpu.memory_space<vmem>>, vector<8x1xf32>
    %cst_8 = arith.constant dense<0.000000e+00> : vector<8xf32>
    %8 = vector.multi_reduction <add>, %2, %cst_8 [1] : vector<8x256xf32> to vector<8xf32>
    %9 = vector.shape_cast %8 : vector<8xf32> to vector<8x1xf32>
    %10 = arith.addf %7, %9 : vector<8x1xf32>
    %c0_9 = arith.constant 0 : index
    %c0_10 = arith.constant 0 : index
    %11 = vector.load %arg4[%c0_9, %c0_10] : memref<8x1xf32, #tpu.memory_space<vmem>>, vector<8x1xf32>
    tpu.vector_store %arg4[%c0_9, %c0_10], %10 {strides = array<i32>} : memref<8x1xf32, #tpu.memory_space<vmem>>, vector<8x1xf32>,
    %c0_11 = arith.constant 0 : index
    %c0_12 = arith.constant 0 : index
    %12 = vector.load %arg5[%c0_11, %c0_12] : memref<8x1xf32, #tpu.memory_space<vmem>>, vector<8x1xf32>
    %13 = arith.mulf %2, %2 : vector<8x256xf32>
    %cst_13 = arith.constant dense<0.000000e+00> : vector<8xf32>
    %14 = vector.multi_reduction <add>, %13, %cst_13 [1] : vector<8x256xf32> to vector<8xf32>
    %15 = vector.shape_cast %14 : vector<8xf32> to vector<8x1xf32>
    %16 = arith.addf %12, %15 : vector<8x1xf32>
    %c0_14 = arith.constant 0 : index
    %c0_15 = arith.constant 0 : index
    %17 = vector.load %arg5[%c0_14, %c0_15] : memref<8x1xf32, #tpu.memory_space<vmem>>, vector<8x1xf32>
    tpu.vector_store %arg5[%c0_14, %c0_15], %16 {strides = array<i32>} : memref<8x1xf32, #tpu.memory_space<vmem>>, vector<8x1xf32>,
    return
  }
  func.func @transform_0(%arg0: i32) -> (i32, i32) {
    %c0_i32 = arith.constant 0 : i32
    %c0_i32_0 = arith.constant 0 : i32
    %c0_i32_1 = arith.constant 0 : i32
    return %c0_i32, %c0_i32_0 : i32, i32
  }
  func.func @transform_1(%arg0: i32) -> (i32, i32) {
    %c0_i32 = arith.constant 0 : i32
    %c0_i32_0 = arith.constant 0 : i32
    return %c0_i32, %arg0 : i32, i32
  }
  func.func @transform_2(%arg0: i32) -> (i32, i32) {
    %c0_i32 = arith.constant 0 : i32
    %c0_i32_0 = arith.constant 0 : i32
    return %c0_i32, %arg0 : i32, i32
  }
  func.func @transform_3(%arg0: i32) -> (i32, i32) {
    %c0_i32 = arith.constant 0 : i32
    %c0_i32_0 = arith.constant 0 : i32
    %c0_i32_1 = arith.constant 0 : i32
    return %c0_i32, %c0_i32_0 : i32, i32
  }
  func.func @transform_4(%arg0: i32) -> (i32, i32) {
    %c0_i32 = arith.constant 0 : i32
    %c0_i32_0 = arith.constant 0 : i32
    %c0_i32_1 = arith.constant 0 : i32
    return %c0_i32, %c0_i32_0 : i32, i32
  }
}

module attributes {stable_mosaic.version = 11 : i64} {
  func.func @bn_act_kernel(%arg0: i32, %arg1: memref<8x256xf32, #tpu.memory_space<vmem>>, %arg2: memref<8x1xf32, #tpu.memory_space<vmem>>, %arg3: memref<8x1xf32, #tpu.memory_space<vmem>>, %arg4: memref<8x256xbf16, #tpu.memory_space<vmem>>) attributes {dimension_semantics = [#tpu.dimension_semantics<parallel>], iteration_bounds = array<i64: 4>, scalar_prefetch = 0 : i64, scratch_operands = 0 : i64, tpu.core_type = #tpu.core_type<tc>, window_params = [{transform_indices = @transform_0, window_bounds = array<i64: 8, 256>}, {pipeline_mode = #tpu.pipeline_mode<synchronous>, transform_indices = @transform_1, window_bounds = array<i64: 8, 1>}, {pipeline_mode = #tpu.pipeline_mode<synchronous>, transform_indices = @transform_2, window_bounds = array<i64: 8, 1>}, {transform_indices = @transform_3, window_bounds = array<i64: 8, 256>}]} {
    %c0 = arith.constant 0 : index
    %c0_0 = arith.constant 0 : index
    %0 = vector.load %arg1[%c0, %c0_0] : memref<8x256xf32, #tpu.memory_space<vmem>>, vector<8x256xf32>
    %c0_1 = arith.constant 0 : index
    %c0_2 = arith.constant 0 : index
    %1 = vector.load %arg2[%c0_1, %c0_2] : memref<8x1xf32, #tpu.memory_space<vmem>>, vector<8x1xf32>
    %2 = vector.broadcast %1 : vector<8x1xf32> to vector<8x256xf32>
    %3 = arith.mulf %0, %2 : vector<8x256xf32>
    %c0_3 = arith.constant 0 : index
    %c0_4 = arith.constant 0 : index
    %4 = vector.load %arg3[%c0_3, %c0_4] : memref<8x1xf32, #tpu.memory_space<vmem>>, vector<8x1xf32>
    %5 = vector.broadcast %4 : vector<8x1xf32> to vector<8x256xf32>
    %6 = arith.addf %3, %5 : vector<8x256xf32>
    %cst = arith.constant 0.000000e+00 : f32
    %7 = vector.broadcast %cst : f32 to vector<8x256xf32>
    %8 = arith.cmpf ogt, %6, %7 : vector<8x256xf32>
    %cst_5 = arith.constant 2.000000e-01 : f32
    %9 = vector.broadcast %cst_5 : f32 to vector<8x256xf32>
    %10 = arith.mulf %9, %6 : vector<8x256xf32>
    %11 = arith.select %8, %6, %10 : vector<8x256xi1>, vector<8x256xf32>
    %12 = arith.truncf %11 : vector<8x256xf32> to vector<8x256xbf16>
    %c0_6 = arith.constant 0 : index
    %c0_7 = arith.constant 0 : index
    %13 = vector.load %arg4[%c0_6, %c0_7] : memref<8x256xbf16, #tpu.memory_space<vmem>>, vector<8x256xbf16>
    tpu.vector_store %arg4[%c0_6, %c0_7], %12 {strides = array<i32>} : memref<8x256xbf16, #tpu.memory_space<vmem>>, vector<8x256xbf16>,
    return
  }
  func.func @transform_0(%arg0: i32) -> (i32, i32) {
    %c0_i32 = arith.constant 0 : i32
    %c0_i32_0 = arith.constant 0 : i32
    return %c0_i32, %arg0 : i32, i32
  }
  func.func @transform_1(%arg0: i32) -> (i32, i32) {
    %c0_i32 = arith.constant 0 : i32
    %c0_i32_0 = arith.constant 0 : i32
    %c0_i32_1 = arith.constant 0 : i32
    return %c0_i32, %c0_i32_0 : i32, i32
  }
  func.func @transform_2(%arg0: i32) -> (i32, i32) {
    %c0_i32 = arith.constant 0 : i32
    %c0_i32_0 = arith.constant 0 : i32
    %c0_i32_1 = arith.constant 0 : i32
    return %c0_i32, %c0_i32_0 : i32, i32
  }
  func.func @transform_3(%arg0: i32) -> (i32, i32) {
    %c0_i32 = arith.constant 0 : i32
    %c0_i32_0 = arith.constant 0 : i32
    return %c0_i32, %arg0 : i32, i32
  }
}

module attributes {stable_mosaic.version = 11 : i64} {
  func.func @bn_add_leaky_kernel(%arg0: i32, %arg1: memref<8x256xf32, #tpu.memory_space<vmem>>, %arg2: memref<8x1xf32, #tpu.memory_space<vmem>>, %arg3: memref<8x1xf32, #tpu.memory_space<vmem>>, %arg4: memref<8x256xbf16, #tpu.memory_space<vmem>>, %arg5: memref<8x256xf32, #tpu.memory_space<vmem>>) attributes {dimension_semantics = [#tpu.dimension_semantics<parallel>], iteration_bounds = array<i64: 4>, scalar_prefetch = 0 : i64, scratch_operands = 0 : i64, tpu.core_type = #tpu.core_type<tc>, window_params = [{transform_indices = @transform_0, window_bounds = array<i64: 8, 256>}, {pipeline_mode = #tpu.pipeline_mode<synchronous>, transform_indices = @transform_1, window_bounds = array<i64: 8, 1>}, {pipeline_mode = #tpu.pipeline_mode<synchronous>, transform_indices = @transform_2, window_bounds = array<i64: 8, 1>}, {transform_indices = @transform_3, window_bounds = array<i64: 8, 256>}, {transform_indices = @transform_4, window_bounds = array<i64: 8, 256>}]} {
    %c0 = arith.constant 0 : index
    %c0_0 = arith.constant 0 : index
    %0 = vector.load %arg1[%c0, %c0_0] : memref<8x256xf32, #tpu.memory_space<vmem>>, vector<8x256xf32>
    %c0_1 = arith.constant 0 : index
    %c0_2 = arith.constant 0 : index
    %1 = vector.load %arg2[%c0_1, %c0_2] : memref<8x1xf32, #tpu.memory_space<vmem>>, vector<8x1xf32>
    %2 = vector.broadcast %1 : vector<8x1xf32> to vector<8x256xf32>
    %3 = arith.mulf %0, %2 : vector<8x256xf32>
    %c0_3 = arith.constant 0 : index
    %c0_4 = arith.constant 0 : index
    %4 = vector.load %arg3[%c0_3, %c0_4] : memref<8x1xf32, #tpu.memory_space<vmem>>, vector<8x1xf32>
    %5 = vector.broadcast %4 : vector<8x1xf32> to vector<8x256xf32>
    %6 = arith.addf %3, %5 : vector<8x256xf32>
    %c0_5 = arith.constant 0 : index
    %c0_6 = arith.constant 0 : index
    %7 = vector.load %arg4[%c0_5, %c0_6] : memref<8x256xbf16, #tpu.memory_space<vmem>>, vector<8x256xbf16>
    %8 = arith.extf %7 : vector<8x256xbf16> to vector<8x256xf32>
    %9 = arith.addf %6, %8 : vector<8x256xf32>
    %cst = arith.constant 0.000000e+00 : f32
    %10 = vector.broadcast %cst : f32 to vector<8x256xf32>
    %11 = arith.cmpf ogt, %9, %10 : vector<8x256xf32>
    %cst_7 = arith.constant 2.000000e-01 : f32
    %12 = vector.broadcast %cst_7 : f32 to vector<8x256xf32>
    %13 = arith.mulf %12, %9 : vector<8x256xf32>
    %14 = arith.select %11, %9, %13 : vector<8x256xi1>, vector<8x256xf32>
    %c0_8 = arith.constant 0 : index
    %c0_9 = arith.constant 0 : index
    %15 = vector.load %arg5[%c0_8, %c0_9] : memref<8x256xf32, #tpu.memory_space<vmem>>, vector<8x256xf32>
    tpu.vector_store %arg5[%c0_8, %c0_9], %14 {strides = array<i32>} : memref<8x256xf32, #tpu.memory_space<vmem>>, vector<8x256xf32>,
    return
  }
  func.func @transform_0(%arg0: i32) -> (i32, i32) {
    %c0_i32 = arith.constant 0 : i32
    %c0_i32_0 = arith.constant 0 : i32
    return %c0_i32, %arg0 : i32, i32
  }
  func.func @transform_1(%arg0: i32) -> (i32, i32) {
    %c0_i32 = arith.constant 0 : i32
    %c0_i32_0 = arith.constant 0 : i32
    %c0_i32_1 = arith.constant 0 : i32
    return %c0_i32, %c0_i32_0 : i32, i32
  }
  func.func @transform_2(%arg0: i32) -> (i32, i32) {
    %c0_i32 = arith.constant 0 : i32
    %c0_i32_0 = arith.constant 0 : i32
    %c0_i32_1 = arith.constant 0 : i32
    return %c0_i32, %c0_i32_0 : i32, i32
  }
  func.func @transform_3(%arg0: i32) -> (i32, i32) {
    %c0_i32 = arith.constant 0 : i32
    %c0_i32_0 = arith.constant 0 : i32
    return %c0_i32, %arg0 : i32, i32
  }
  func.func @transform_4(%arg0: i32) -> (i32, i32) {
    %c0_i32 = arith.constant 0 : i32
    %c0_i32_0 = arith.constant 0 : i32
    return %c0_i32, %arg0 : i32, i32
  }
}

</mosaic_0001>

<llo_original>
// kernel: down_transition_forward.6
$region0: #{down_transition_forward.6}
  #allocation0 [shape = 'u32[]', space=smem, size = 0x4, offset = 0x4, fixed_abs, tag = 'smem constant byte address 0x4 - core index']
  #allocation1 [shape = 'u32[144,128]{1,0:T(1,128)}', space=vmem, size = 0x12000, scoped, tag = 'internal scratch']
  %s0 = inlined_call_operand.vmem [shape: bf16[8,32], index: 0, kind: input, shape index: {}]
  %s1 = inlined_call_operand.vmem [shape: bf16[32,1024], index: 1, kind: input, shape index: {}]
  %s2 = inlined_call_operand.vmem [shape: f32[8,1024], index: 2, kind: output, shape index: {0}]
  %s3 = inlined_call_operand.vmem [shape: f32[8,1], index: 3, kind: output, shape index: {1}]
  %s4 = inlined_call_operand.vmem [shape: f32[8,1], index: 4, kind: output, shape index: {2}]
  %5 = xla_tuple %s2, %s3, %s4
  %s6 = sld [smem:[#allocation0]]
  $region99: #{down_transition_forward.6} parent=0
    _
  %s8 = ssub.s32 1, %s6
  %s9 = scalar_select 0, %s8, %s6
  $region1: #{down_transition_forward.6} parent=0
    #allocation2 [shape = 'u8[32768]{0}', space=vmem, size = 0x8000, scoped, tag = 'input window, operand 1']
    loop: start=0, step=1, limit=6
    $region2: #{down_transition_forward.6} parent=1 // loop_pre_header
      _
    $region3: #{down_transition_forward.6} parent=1 // loop_header
      %s11 = sphi 0, %s15
      %p12 = scmp.ge.s32.totalorder %s11, 6
      %s19 = sphi 0, %s19
      %s21 = sphi 0, %s19
      %s22 = sphi 0, %s21
      %s36 = sphi 0, %s22
      %s42 = sphi 0, %s44
      %s45 = sphi 0, %s42
      %s46 = sphi 0, %s45
      %s62 = sphi 0, %s46
      %s68 = sphi 0, %s70
      %s71 = sphi 0, %s68
      %s72 = sphi 0, %s71
      %s88 = sphi 0, %s72
      %s92 = sphi 0, %s92
      %s94 = sphi 0, %s92
      %s95 = sphi 0, %s94
      %s109 = sphi 0, %s95
      %s113 = sphi 0, %s113
      %s115 = sphi 0, %s113
      %s116 = sphi 0, %s115
      %s130 = sphi 0, %s116
    $region4: #{down_transition_forward.6} parent=1 // loop_header_branch
      %14 = sbr.rel (%p12) target = $region8
    $region5: #{down_transition_forward.6} parent=1 // loop_body
      %s16 = ssub.s32 %s11, 1
      %s17 = ssub.s32 %s11, 2
      %s18 = sadd.s32 %s11, 1
      %s20 = sadd.s32 %s19, 1
      %p23 = scmp.eq.s32.totalorder %s11, 3
      %p24 = scmp.ne.s32.totalorder %s19, %s21
      %p25 = scmp.eq.s32.totalorder %s11, 0
      %p26 = por %p24, %p25
      %p27 = scmp.ne.s32.totalorder %s19, %s21
      %p28 = scmp.eq.s32.totalorder %s16, 3
      %p29 = por %p27, %p28
      %p30 = scmp.ne.s32.totalorder %s21, %s22
      %p31 = scmp.eq.s32.totalorder %s16, 0
      %p32 = por %p30, %p31
      %p33 = scmp.ne.s32.totalorder %s21, %s22
      %p34 = scmp.eq.s32.totalorder %s17, 3
      %p35 = por %p33, %p34
      %p37 = scmp.ne.s32.totalorder %s22, %s36
      %p38 = scmp.eq.s32.totalorder %s17, 0
      %p39 = por %p37, %p38
      %s40 = ssub.s32 %s11, %s18
      %p41 = scmp.eq.s32.totalorder %s40, 0
      %s43 = sadd.s32 %s42, 1
      %s44 = scalar_select %p41, %s42, %s43
      %p47 = pneg %p41
      %p48 = scmp.eq.s32.totalorder %s11, 3
      %p49 = por %p47, %p48
      %p50 = scmp.ne.s32.totalorder %s42, %s45
      %p51 = scmp.eq.s32.totalorder %s11, 0
      %p52 = por %p50, %p51
      %p53 = scmp.ne.s32.totalorder %s42, %s45
      %p54 = scmp.eq.s32.totalorder %s16, 3
      %p55 = por %p53, %p54
      %p56 = scmp.ne.s32.totalorder %s45, %s46
      %p57 = scmp.eq.s32.totalorder %s16, 0
      %p58 = por %p56, %p57
      %p59 = scmp.ne.s32.totalorder %s45, %s46
      %p60 = scmp.eq.s32.totalorder %s17, 3
      %p61 = por %p59, %p60
      %p63 = scmp.ne.s32.totalorder %s46, %s62
      %p64 = scmp.eq.s32.totalorder %s17, 0
      %p65 = por %p63, %p64
      %s66 = ssub.s32 %s11, %s18
      %p67 = scmp.eq.s32.totalorder %s66, 0
      %s69 = sadd.s32 %s68, 1
      %s70 = scalar_select %p67, %s68, %s69
      %p73 = pneg %p67
      %p74 = scmp.eq.s32.totalorder %s11, 3
      %p75 = por %p73, %p74
      %p76 = scmp.ne.s32.totalorder %s68, %s71
      %p77 = scmp.eq.s32.totalorder %s11, 0
      %p78 = por %p76, %p77
      %p79 = scmp.ne.s32.totalorder %s68, %s71
      %p80 = scmp.eq.s32.totalorder %s16, 3
      %p81 = por %p79, %p80
      %p82 = scmp.ne.s32.totalorder %s71, %s72
      %p83 = scmp.eq.s32.totalorder %s16, 0
      %p84 = por %p82, %p83
      %p85 = scmp.ne.s32.totalorder %s71, %s72
      %p86 = scmp.eq.s32.totalorder %s17, 3
      %p87 = por %p85, %p86
      %p89 = scmp.ne.s32.totalorder %s72, %s88
      %p90 = scmp.eq.s32.totalorder %s17, 0
      %p91 = por %p89, %p90
      %s93 = sadd.s32 %s92, 1
      %p96 = scmp.eq.s32.totalorder %s11, 3
      %p97 = scmp.ne.s32.totalorder %s92, %s94
      %p98 = scmp.eq.s32.totalorder %s11, 0
      %p99 = por %p97, %p98
      %p100 = scmp.ne.s32.totalorder %s92, %s94
      %p101 = scmp.eq.s32.totalorder %s16, 3
      %p102 = por %p100, %p101
      %p103 = scmp.ne.s32.totalorder %s94, %s95
      %p104 = scmp.eq.s32.totalorder %s16, 0
      %p105 = por %p103, %p104
      %p106 = scmp.ne.s32.totalorder %s94, %s95
      %p107 = scmp.eq.s32.totalorder %s17, 3
      %p108 = por %p106, %p107
      %p110 = scmp.ne.s32.totalorder %s95, %s109
      %p111 = scmp.eq.s32.totalorder %s17, 0
      %p112 = por %p110, %p111
      %s114 = sadd.s32 %s113, 1
      %p117 = scmp.eq.s32.totalorder %s11, 3
      %p118 = scmp.ne.s32.totalorder %s113, %s115
      %p119 = scmp.eq.s32.totalorder %s11, 0
      %p120 = por %p118, %p119
      %p121 = scmp.ne.s32.totalorder %s113, %s115
      %p122 = scmp.eq.s32.totalorder %s16, 3
      %p123 = por %p121, %p122
      %p124 = scmp.ne.s32.totalorder %s115, %s116
      %p125 = scmp.eq.s32.totalorder %s16, 0
      %p126 = por %p124, %p125
      %p127 = scmp.ne.s32.totalorder %s115, %s116
      %p128 = scmp.eq.s32.totalorder %s17, 3
      %p129 = por %p127, %p128
      %p131 = scmp.ne.s32.totalorder %s116, %s130
      %p132 = scmp.eq.s32.totalorder %s17, 0
      %p133 = por %p131, %p132
      %p134 = scmp.le.s32.totalorder 1, %s11
      %p135 = scmp.lt.s32.totalorder %s11, 5
      %p136 = pnand %p134, %p135
      %p137 = pneg %p136
      // Predicated region
      $region9: #{down_transition_forward.6} parent=5 // pred_check
        _
      $region10: #{down_transition_forward.6} parent=5 // pred_check_branch
        %139 = sbr.rel (%p136) target = $region12
      $region11: #{down_transition_forward.6} parent=5 // pred_region
        %s140 = ssub.s32 %s11, 1
        // Predicated region
        $region13: #{down_transition_forward.6} parent=11 // pred_check
          %p141 = pneg %p32
        $region14: #{down_transition_forward.6} parent=11 // pred_check_branch
          %143 = sbr.rel (%p141) target = $region16
        $region15: #{down_transition_forward.6} parent=11 // pred_region
          _
        $region16: #{down_transition_forward.6} parent=11 // pred_fallthru
          _
      $region12: #{down_transition_forward.6} parent=5 // pred_fallthru
        _
      %p144 = scmp.lt.s32.totalorder %s11, 4
      // Predicated region
      $region17: #{down_transition_forward.6} parent=5 // pred_check
        %p145 = pneg %p144
      $region18: #{down_transition_forward.6} parent=5 // pred_check_branch
        %147 = sbr.rel (%p145) target = $region20
      $region19: #{down_transition_forward.6} parent=5 // pred_region
        // Predicated region
        $region21: #{down_transition_forward.6} parent=19 // pred_check
          %p148 = pneg %p52
        $region22: #{down_transition_forward.6} parent=19 // pred_check_branch
          %150 = sbr.rel (%p148) target = $region24
        $region23: #{down_transition_forward.6} parent=19 // pred_region
          %s151 = sand.u32 %s42, 1
          %s152 = sand.u32 %s42, 1
          %s153 = smul.addr %s152, 32
          %s154 = scalar_lea.vmem [#allocation2], %s153
          %s155 = smul.u32 2, %s11
          %s156 = smul.addr %s155, 4
          %s157 = scalar_lea.vmem %s1, %s156
          // Predicated region
          $region25: #{down_transition_forward.6} parent=23 // pred_check
            _
          $region26: #{down_transition_forward.6} parent=23 // pred_check_branch
            %159 = sbr.rel (0) target = $region28
          $region27: #{down_transition_forward.6} parent=23 // pred_region
            // Predicated region
            $region29: #{down_transition_forward.6} parent=27 // pred_check
              _
            $region30: #{down_transition_forward.6} parent=27 // pred_check_branch
              %161 = sbr.rel (0) target = $region32
            $region31: #{down_transition_forward.6} parent=27 // pred_region
              // Predicated region
              $region44: #{down_transition_forward.6} parent=31 // pred_check
                _
              $region45: #{down_transition_forward.6} parent=31 // pred_check_branch
                %183 = sbr.rel (0) target = $region47
              $region46: #{down_transition_forward.6} parent=31 // pred_region
                loop: start=0, step=1, limit=1
                $region48: #{down_transition_forward.6} parent=46 // loop_pre_header
                  _
                $region49: #{down_transition_forward.6} parent=46 // loop_header
                  %s185 = sphi 0, %s189
                  %p186 = scmp.ge.s32.totalorder %s185, 1
                  %s190 = sphi %s157, %s157
                  %s191 = sphi %s154, %s154
                $region50: #{down_transition_forward.6} parent=46 // loop_header_branch
                  %188 = sbr.rel (%p186) target = $region54
                $region51: #{down_transition_forward.6} parent=46 // loop_body
                  %v192 = vld [vmem:[%s190] sm:$0xff]
                  %193 = vst [vmem:[%s191] sm:$0xff] %v192
                  %v194 = vld [vmem:[%s190 + $0x20] sm:$0xff]
                  %195 = vst [vmem:[%s191 + $0x8] sm:$0xff] %v194
                  %v196 = vld [vmem:[%s190 + $0x40] sm:$0xff]
                  %197 = vst [vmem:[%s191 + $0x10] sm:$0xff] %v196
                  %v198 = vld [vmem:[%s190 + $0x60] sm:$0xff]
                  %199 = vst [vmem:[%s191 + $0x18] sm:$0xff] %v198
                $region52: #{down_transition_forward.6} parent=46 // loop_footer
                  %s189 = sadd.s32 1, %s185
                $region53: #{down_transition_forward.6} parent=46 // loop_footer_branch
                  %184 = sbr.rel target = $region49
                $region54: #{down_transition_forward.6} parent=46 // loop_exit
                  _
              $region47: #{down_transition_forward.6} parent=31 // pred_fallthru
                _
              // Predicated region
              $region55: #{down_transition_forward.6} parent=31 // pred_check
                _
              $region56: #{down_transition_forward.6} parent=31 // pred_check_branch
                %201 = sbr.rel target = $region58
              $region57: #{down_transition_forward.6} parent=31 // pred_region
                _
              $region58: #{down_transition_forward.6} parent=31 // pred_fallthru
                _
            $region32: #{down_transition_forward.6} parent=27 // pred_fallthru
              _
            // Predicated region
            $region33: #{down_transition_forward.6} parent=27 // pred_check
              _
            $region34: #{down_transition_forward.6} parent=27 // pred_check_branch
              %163 = sbr.rel target = $region36
            $region35: #{down_transition_forward.6} parent=27 // pred_region
              %s165 = ssub.s32 256, 1
              loop: start=0, step=1, limit=1
              $region37: #{down_transition_forward.6} parent=35 // loop_pre_header
                _
              $region38: #{down_transition_forward.6} parent=35 // loop_header
                %s167 = sphi 0, %s171
                %p168 = scmp.ge.s32.totalorder %s167, 1
                %s172 = sphi %s157, %s157
                %s173 = sphi %s154, %s154
              $region39: #{down_transition_forward.6} parent=35 // loop_header_branch
                %170 = sbr.rel (%p168) target = $region43
              $region40: #{down_transition_forward.6} parent=35 // loop_body
                %v174 = vld [vmem:[%s172] sm:%s165]
                %175 = vst [vmem:[%s173] sm:%s165] %v174
                %v176 = vld [vmem:[%s172 + $0x20] sm:%s165]
                %177 = vst [vmem:[%s173 + $0x8] sm:%s165] %v176
                %v178 = vld [vmem:[%s172 + $0x40] sm:%s165]
                %179 = vst [vmem:[%s173 + $0x10] sm:%s165] %v178
                %v180 = vld [vmem:[%s172 + $0x60] sm:%s165]
                %181 = vst [vmem:[%s173 + $0x18] sm:%s165] %v180
              $region41: #{down_transition_forward.6} parent=35 // loop_footer
                %s171 = sadd.s32 1, %s167
              $region42: #{down_transition_forward.6} parent=35 // loop_footer_branch
                %166 = sbr.rel target = $region38
              $region43: #{down_transition_forward.6} parent=35 // loop_exit
                _
            $region36: #{down_transition_forward.6} parent=27 // pred_fallthru
              _
          $region28: #{down_transition_forward.6} parent=23 // pred_fallthru
            _
          %202 = vnop
        $region24: #{down_transition_forward.6} parent=19 // pred_fallthru
          _
      $region20: #{down_transition_forward.6} parent=5 // pred_fallthru
        _
      %p203 = scmp.le.s32.totalorder 1, %s11
      %p204 = scmp.lt.s32.totalorder %s11, 5
      %p205 = pnand %p203, %p204
      %p206 = pneg %p205
      // Predicated region
      $region59: #{down_transition_forward.6} parent=5 // pred_check
        _
      $region60: #{down_transition_forward.6} parent=5 // pred_check_branch
        %208 = sbr.rel (%p205) target = $region62
      $region61: #{down_transition_forward.6} parent=5 // pred_region
        %s209 = ssub.s32 %s11, 1
        %s210 = sand.u32 %s45, 1
        %s211 = sand.u32 %s45, 1
        %s212 = smul.addr %s211, 32
        %s213 = scalar_lea.vmem [#allocation2], %s212
        // Predicated region
        $region63: #{down_transition_forward.6} parent=61 // pred_check
          %p214 = pneg %p58
        $region64: #{down_transition_forward.6} parent=61 // pred_check_branch
          %216 = sbr.rel (%p214) target = $region66
        $region65: #{down_transition_forward.6} parent=61 // pred_region
          _
        $region66: #{down_transition_forward.6} parent=61 // pred_fallthru
          _
        %p217 = pneg %p32
        %p218 = pneg %p29
        %s219 = sand.u32 %s45, 1
        %s220 = sand.u32 %s45, 1
        %s221 = smul.addr %s220, 32
        %s222 = scalar_lea.vmem [#allocation2], %s221
        %p223 = pneg %p58
        %p224 = pneg %p55
        %p225 = pneg %p84
        %p226 = pneg %p81
        %s227 = smul.u32 2, %s16
        %p228 = scmp.lt.s32.totalorder %s227, 7
        %s229 = scalar_select %p228, %s227, 7
        %s230 = smul.addr %s229, 8
        %s231 = scalar_lea.vmem %s2, %s230
        %p232 = pneg %p105
        %p233 = pneg %p102
        %p234 = pneg %p126
        %p235 = pneg %p123
        %s236 = smul.u32 2, %s16
        %s237 = smul.u32 2, %s16
        %p238 = scmp.lt.s32.totalorder %s237, 7
        %s239 = scalar_select %p238, %s237, 7
        %s240 = smul.addr %s239, 8
        %s241 = scalar_lea.vmem %s2, %s240
        %s242 = smul.u32 2, %s16
        %v244 = vld [vmem:[%s0] sm:$0xf]
        %v245 = vld [vmem:[%s213] sm:$0xff]
        %v246 = vld [vmem:[%s213 + $0x8] sm:$0xff]
        %v247 = vld [vmem:[%s213 + $0x10] sm:$0xff]
        %v248 = vld [vmem:[%s213 + $0x18] sm:$0xff]
        %v253 = vunpack.c.l.b16 %v245
        %v254 = vunpack.c.h.b16 %v245
        %v255 = vunpack.c.l.b16 %v246
        %v256 = vunpack.c.h.b16 %v246
        %v257 = vunpack.c.l.b16 %v247
        %v258 = vunpack.c.h.b16 %v247
        %v259 = vunpack.c.l.b16 %v248
        %v260 = vunpack.c.h.b16 %v248
        %v261 = vpack.c.b16 %v255, %v253
        %v262 = vpack.c.b16 %v256, %v254
        %v263 = vpack.c.b16 %v259, %v257
        %v264 = vpack.c.b16 %v260, %v258
        %vm269 = vcmask 261120
        %v271 = vsel %vm269, %v244, 0
        %273 = vmatprep.subr.bf16.mxu0 0
        %274 = vmatpush1.bf16.msra.mxu0 0
        %275 = vmatprep.subr.bf16.mxu0 0
        %276 = vmatpush1.bf16.msra.mxu0 0
        %277 = vmatprep.subr.bf16.mxu0 0
        %278 = vmatpush1.bf16.msra.mxu0 0
        %279 = vmatprep.subr.bf16.mxu0 0
        %280 = vmatpush1.bf16.msra.mxu0 0
        %281 = vmatprep.subr.bf16.mxu0 0
        %282 = vmatpush1.bf16.msra.mxu0 0
        %283 = vmatprep.subr.bf16.mxu0 0
        %284 = vmatpush1.bf16.msra.mxu0 0
        %285 = vmatprep.subr.bf16.mxu0 %v264
        %286 = vmatpush1.bf16.msra.mxu0 %v263
        %287 = vmatprep.subr.bf16.mxu0 %v262
        %288 = vmatpush1.bf16.msra.mxu0 %v261
        %289 = vmatprep.subr.bf16.mxu0 0
        %290 = vmatpush2.bf16.msra.mxu0 0
        %291 = vmatprep.subr.bf16.mxu0 0
        %292 = vmatpush2.bf16.msra.mxu0 0
        %293 = vmatprep.subr.bf16.mxu0 0
        %294 = vmatpush2.bf16.msra.mxu0 0
        %295 = vmatprep.subr.bf16.mxu0 0
        %296 = vmatpush2.bf16.msra.mxu0 0
        %297 = vmatprep.subr.bf16.mxu0 0
        %298 = vmatpush2.bf16.msra.mxu0 0
        %299 = vmatprep.subr.bf16.mxu0 0
        %300 = vmatpush2.bf16.msra.mxu0 0
        %301 = vmatprep.subr.bf16.mxu0 0
        %302 = vmatpush2.bf16.msra.mxu0 0
        %303 = vmatprep.subr.bf16.mxu0 0
        %304 = vmatpush2.bf16.msra.mxu0 0
        %305 = vmatprep.mubr.bf16.mxu0 0
        %306 = vmatmul.mubr.bf16.gmra.mxu0 %v271
        %v307 = vpop.f32.mrf.mxu0
        %v308 = vadd.f32 0.0, %v307
        %v309 = vpop.f32.mrf.mxu0
        %v310 = vadd.f32 0.0, %v309
        %v311 = vpop.f32.mrf.mxu0
        %v312 = vpop.f32.mrf.mxu0
        %313 = vdwg.mxu0
        %314 = vst [vmem:[%s241] sm:$0xff] %v308
        %315 = vst [vmem:[%s241 + $0x8] sm:$0xff] %v310
        %p316 = scmp.eq.s32.totalorder %s16, 0
        // Predicated region
        $region67: #{down_transition_forward.6} parent=61 // pred_check
          %p317 = pneg %p316
        $region68: #{down_transition_forward.6} parent=61 // pred_check_branch
          %319 = sbr.rel (%p317) target = $region70
        $region69: #{down_transition_forward.6} parent=61 // pred_region
          %vm320 = vcmask 7168
          %321 = vst.msk [vmem:[%s3] sm:$0xff] %vm320, 0.0
          %322 = vst.msk [vmem:[%s4] sm:$0xff] %vm320, 0.0
        $region70: #{down_transition_forward.6} parent=61 // pred_fallthru
          _
        %v323 = vld [vmem:[%s3] sm:$0xff]
        %v324 = vadd.f32 %v308, %v310
        %325 = vadd.xlane.f32.xlu0 %v324
        %v326 = vpop.xlane.xlu0 %325
        %v327 = vadd.f32 %v323, %v326
        %vm328 = vcmask 7168
        %329 = vst.msk [vmem:[%s3] sm:$0xff] %vm328, %v327
        %v330 = vld [vmem:[%s4] sm:$0xff]
        %v331 = vmul.f32 %v308, %v308
        %v332 = vmul.f32 %v310, %v310
        %v333 = vadd.f32 %v331, %v332
        %334 = vadd.xlane.f32.xlu0 %v333
        %v335 = vpop.xlane.xlu0 %334
        %v336 = vadd.f32 %v330, %v335
        %337 = vst.msk [vmem:[%s4] sm:$0xff] %vm328, %v336
        %s338 = smul.u32 2, %s16
        %p339 = scmp.lt.s32.totalorder %s338, 7
        %s340 = scalar_select %p339, %s338, 7
        %s341 = smul.addr %s340, 8
        %s342 = scalar_lea.vmem %s2, %s341
        // Predicated region
        $region71: #{down_transition_forward.6} parent=61 // pred_check
          %p343 = pneg %p81
        $region72: #{down_transition_forward.6} parent=61 // pred_check_branch
          %345 = sbr.rel (%p343) target = $region74
        $region73: #{down_transition_forward.6} parent=61 // pred_region
          %s346 = smul.u32 2, %s16
        $region74: #{down_transition_forward.6} parent=61 // pred_fallthru
          _
        // Predicated region
        $region75: #{down_transition_forward.6} parent=61 // pred_check
          %p347 = pneg %p102
        $region76: #{down_transition_forward.6} parent=61 // pred_check_branch
          %349 = sbr.rel (%p347) target = $region78
        $region77: #{down_transition_forward.6} parent=61 // pred_region
          _
        $region78: #{down_transition_forward.6} parent=61 // pred_fallthru
          _
        // Predicated region
        $region79: #{down_transition_forward.6} parent=61 // pred_check
          %p350 = pneg %p123
        $region80: #{down_transition_forward.6} parent=61 // pred_check_branch
          %352 = sbr.rel (%p350) target = $region82
        $region81: #{down_transition_forward.6} parent=61 // pred_region
          _
        $region82: #{down_transition_forward.6} parent=61 // pred_fallthru
          _
        // Predicated region
        $region83: #{down_transition_forward.6} parent=61 // pred_check
          %p353 = pneg %p102
        $region84: #{down_transition_forward.6} parent=61 // pred_check_branch
          %355 = sbr.rel (%p353) target = $region86
        $region85: #{down_transition_forward.6} parent=61 // pred_region
          _
        $region86: #{down_transition_forward.6} parent=61 // pred_fallthru
          _
        // Predicated region
        $region87: #{down_transition_forward.6} parent=61 // pred_check
          %p356 = pneg %p123
        $region88: #{down_transition_forward.6} parent=61 // pred_check_branch
          %358 = sbr.rel (%p356) target = $region90
        $region89: #{down_transition_forward.6} parent=61 // pred_region
          _
        $region90: #{down_transition_forward.6} parent=61 // pred_fallthru
          _
      $region62: #{down_transition_forward.6} parent=5 // pred_fallthru
        _
      %p359 = scmp.le.s32.totalorder 2, %s11
      // Predicated region
      $region91: #{down_transition_forward.6} parent=5 // pred_check
        %p360 = pneg %p359
      $region92: #{down_transition_forward.6} parent=5 // pred_check_branch
        %362 = sbr.rel (%p360) target = $region94
      $region93: #{down_transition_forward.6} parent=5 // pred_region
        %s363 = ssub.s32 %s11, 2
        // Predicated region
        $region95: #{down_transition_forward.6} parent=93 // pred_check
          %p364 = pneg %p87
        $region96: #{down_transition_forward.6} parent=93 // pred_check_branch
          %366 = sbr.rel (%p364) target = $region98
        $region97: #{down_transition_forward.6} parent=93 // pred_region
          %s367 = smul.u32 2, %s17
          %p368 = scmp.lt.s32.totalorder %s367, 7
          %s369 = scalar_select %p368, %s367, 7
          %s370 = smul.addr %s369, 8
          %s371 = scalar_lea.vmem %s2, %s370
        $region98: #{down_transition_forward.6} parent=93 // pred_fallthru
          _
      $region94: #{down_transition_forward.6} parent=5 // pred_fallthru
        _
    $region6: #{down_transition_forward.6} parent=1 // loop_footer
      %s15 = sadd.s32 1, %s11
    $region7: #{down_transition_forward.6} parent=1 // loop_footer_branch
      %10 = sbr.rel target = $region3
    $region8: #{down_transition_forward.6} parent=1 // loop_exit
      _

// kernel: down_transition_forward.7
$region0: #{down_transition_forward.7}
  #allocation0 [shape = 'u32[]', space=smem, size = 0x4, offset = 0x4, fixed_abs, tag = 'smem constant byte address 0x4 - core index']
  #allocation1 [shape = 'u32[144,128]{1,0:T(1,128)}', space=vmem, size = 0x12000, scoped, tag = 'internal scratch']
  %s0 = inlined_call_operand.vmem [shape: f32[8,1024], index: 0, kind: input, shape index: {}]
  %s1 = inlined_call_operand.vmem [shape: f32[8,1], index: 1, kind: input, shape index: {}]
  %s2 = inlined_call_operand.vmem [shape: f32[8,1], index: 2, kind: input, shape index: {}]
  %s3 = inlined_call_operand.vmem [shape: bf16[8,1024], index: 3, kind: output, shape index: {}]
  %s4 = sld [smem:[#allocation0]]
  $region45: #{down_transition_forward.7} parent=0
    _
  %s6 = ssub.s32 1, %s4
  %s7 = scalar_select 0, %s6, %s4
  loop: start=0, step=1, limit=6
  $region2: #{down_transition_forward.7} parent=0 // loop_pre_header
    _
  $region3: #{down_transition_forward.7} parent=0 // loop_header
    %s9 = sphi 0, %s13
    %p10 = scmp.ge.s32.totalorder %s9, 6
    %s19 = sphi 0, %s21
    %s22 = sphi 0, %s19
    %s23 = sphi 0, %s22
    %s39 = sphi 0, %s23
    %s43 = sphi 0, %s43
    %s45 = sphi 0, %s43
    %s46 = sphi 0, %s45
    %s60 = sphi 0, %s46
    %s64 = sphi 0, %s64
    %s66 = sphi 0, %s64
    %s67 = sphi 0, %s66
    %s81 = sphi 0, %s67
    %s87 = sphi 0, %s89
    %s90 = sphi 0, %s87
    %s91 = sphi 0, %s90
    %s107 = sphi 0, %s91
  $region4: #{down_transition_forward.7} parent=0 // loop_header_branch
    %12 = sbr.rel (%p10) target = $region8
  $region5: #{down_transition_forward.7} parent=0 // loop_body
    %s14 = ssub.s32 %s9, 1
    %s15 = ssub.s32 %s9, 2
    %s16 = sadd.s32 %s9, 1
    %s17 = ssub.s32 %s9, %s16
    %p18 = scmp.eq.s32.totalorder %s17, 0
    %s20 = sadd.s32 %s19, 1
    %s21 = scalar_select %p18, %s19, %s20
    %p24 = pneg %p18
    %p25 = scmp.eq.s32.totalorder %s9, 3
    %p26 = por %p24, %p25
    %p27 = scmp.ne.s32.totalorder %s19, %s22
    %p28 = scmp.eq.s32.totalorder %s9, 0
    %p29 = por %p27, %p28
    %p30 = scmp.ne.s32.totalorder %s19, %s22
    %p31 = scmp.eq.s32.totalorder %s14, 3
    %p32 = por %p30, %p31
    %p33 = scmp.ne.s32.totalorder %s22, %s23
    %p34 = scmp.eq.s32.totalorder %s14, 0
    %p35 = por %p33, %p34
    %p36 = scmp.ne.s32.totalorder %s22, %s23
    %p37 = scmp.eq.s32.totalorder %s15, 3
    %p38 = por %p36, %p37
    %p40 = scmp.ne.s32.totalorder %s23, %s39
    %p41 = scmp.eq.s32.totalorder %s15, 0
    %p42 = por %p40, %p41
    %s44 = sadd.s32 %s43, 1
    %p47 = scmp.eq.s32.totalorder %s9, 3
    %p48 = scmp.ne.s32.totalorder %s43, %s45
    %p49 = scmp.eq.s32.totalorder %s9, 0
    %p50 = por %p48, %p49
    %p51 = scmp.ne.s32.totalorder %s43, %s45
    %p52 = scmp.eq.s32.totalorder %s14, 3
    %p53 = por %p51, %p52
    %p54 = scmp.ne.s32.totalorder %s45, %s46
    %p55 = scmp.eq.s32.totalorder %s14, 0
    %p56 = por %p54, %p55
    %p57 = scmp.ne.s32.totalorder %s45, %s46
    %p58 = scmp.eq.s32.totalorder %s15, 3
    %p59 = por %p57, %p58
    %p61 = scmp.ne.s32.totalorder %s46, %s60
    %p62 = scmp.eq.s32.totalorder %s15, 0
    %p63 = por %p61, %p62
    %s65 = sadd.s32 %s64, 1
    %p68 = scmp.eq.s32.totalorder %s9, 3
    %p69 = scmp.ne.s32.totalorder %s64, %s66
    %p70 = scmp.eq.s32.totalorder %s9, 0
    %p71 = por %p69, %p70
    %p72 = scmp.ne.s32.totalorder %s64, %s66
    %p73 = scmp.eq.s32.totalorder %s14, 3
    %p74 = por %p72, %p73
    %p75 = scmp.ne.s32.totalorder %s66, %s67
    %p76 = scmp.eq.s32.totalorder %s14, 0
    %p77 = por %p75, %p76
    %p78 = scmp.ne.s32.totalorder %s66, %s67
    %p79 = scmp.eq.s32.totalorder %s15, 3
    %p80 = por %p78, %p79
    %p82 = scmp.ne.s32.totalorder %s67, %s81
    %p83 = scmp.eq.s32.totalorder %s15, 0
    %p84 = por %p82, %p83
    %s85 = ssub.s32 %s9, %s16
    %p86 = scmp.eq.s32.totalorder %s85, 0
    %s88 = sadd.s32 %s87, 1
    %s89 = scalar_select %p86, %s87, %s88
    %p92 = pneg %p86
    %p93 = scmp.eq.s32.totalorder %s9, 3
    %p94 = por %p92, %p93
    %p95 = scmp.ne.s32.totalorder %s87, %s90
    %p96 = scmp.eq.s32.totalorder %s9, 0
    %p97 = por %p95, %p96
    %p98 = scmp.ne.s32.totalorder %s87, %s90
    %p99 = scmp.eq.s32.totalorder %s14, 3
    %p100 = por %p98, %p99
    %p101 = scmp.ne.s32.totalorder %s90, %s91
    %p102 = scmp.eq.s32.totalorder %s14, 0
    %p103 = por %p101, %p102
    %p104 = scmp.ne.s32.totalorder %s90, %s91
    %p105 = scmp.eq.s32.totalorder %s15, 3
    %p106 = por %p104, %p105
    %p108 = scmp.ne.s32.totalorder %s91, %s107
    %p109 = scmp.eq.s32.totalorder %s15, 0
    %p110 = por %p108, %p109
    %p111 = scmp.le.s32.totalorder 1, %s9
    %p112 = scmp.lt.s32.totalorder %s9, 5
    %p113 = pnand %p111, %p112
    %p114 = pneg %p113
    // Predicated region
    $region9: #{down_transition_forward.7} parent=5 // pred_check
      _
    $region10: #{down_transition_forward.7} parent=5 // pred_check_branch
      %116 = sbr.rel (%p113) target = $region12
    $region11: #{down_transition_forward.7} parent=5 // pred_region
      %s117 = ssub.s32 %s9, 1
      // Predicated region
      $region13: #{down_transition_forward.7} parent=11 // pred_check
        %p118 = pneg %p56
      $region14: #{down_transition_forward.7} parent=11 // pred_check_branch
        %120 = sbr.rel (%p118) target = $region16
      $region15: #{down_transition_forward.7} parent=11 // pred_region
        _
      $region16: #{down_transition_forward.7} parent=11 // pred_fallthru
        _
      // Predicated region
      $region17: #{down_transition_forward.7} parent=11 // pred_check
        %p121 = pneg %p77
      $region18: #{down_transition_forward.7} parent=11 // pred_check_branch
        %123 = sbr.rel (%p121) target = $region20
      $region19: #{down_transition_forward.7} parent=11 // pred_region
        _
      $region20: #{down_transition_forward.7} parent=11 // pred_fallthru
        _
    $region12: #{down_transition_forward.7} parent=5 // pred_fallthru
      _
    %p124 = scmp.lt.s32.totalorder %s9, 4
    // Predicated region
    $region21: #{down_transition_forward.7} parent=5 // pred_check
      %p125 = pneg %p124
    $region22: #{down_transition_forward.7} parent=5 // pred_check_branch
      %127 = sbr.rel (%p125) target = $region24
    $region23: #{down_transition_forward.7} parent=5 // pred_region
      // Predicated region
      $region25: #{down_transition_forward.7} parent=23 // pred_check
        %p128 = pneg %p29
      $region26: #{down_transition_forward.7} parent=23 // pred_check_branch
        %130 = sbr.rel (%p128) target = $region28
      $region27: #{down_transition_forward.7} parent=23 // pred_region
        %s131 = smul.u32 2, %s9
        %p132 = scmp.lt.s32.totalorder %s131, 7
        %s133 = scalar_select %p132, %s131, 7
        %s134 = smul.addr %s133, 8
        %s135 = scalar_lea.vmem %s0, %s134
        %s136 = smul.u32 2, %s9
      $region28: #{down_transition_forward.7} parent=23 // pred_fallthru
        _
    $region24: #{down_transition_forward.7} parent=5 // pred_fallthru
      _
    %p137 = scmp.le.s32.totalorder 1, %s9
    %p138 = scmp.lt.s32.totalorder %s9, 5
    %p139 = pnand %p137, %p138
    %p140 = pneg %p139
    // Predicated region
    $region29: #{down_transition_forward.7} parent=5 // pred_check
      _
    $region30: #{down_transition_forward.7} parent=5 // pred_check_branch
      %142 = sbr.rel (%p139) target = $region32
    $region31: #{down_transition_forward.7} parent=5 // pred_region
      %s143 = ssub.s32 %s9, 1
      %s144 = smul.u32 2, %s14
      %p145 = scmp.lt.s32.totalorder %s144, 7
      %s146 = scalar_select %p145, %s144, 7
      %s147 = smul.addr %s146, 8
      %s148 = scalar_lea.vmem %s0, %s147
      %p149 = pneg %p35
      %p150 = pneg %p32
      %p151 = pneg %p56
      %p152 = pneg %p53
      %p153 = pneg %p77
      %p154 = pneg %p74
      %p155 = pneg %p103
      %p156 = pneg %p100
      %s157 = smul.u32 2, %s14
      %p158 = scmp.lt.s32.totalorder %s157, 7
      %s159 = scalar_select %p158, %s157, 7
      %s160 = smul.addr %s159, 4
      %s161 = scalar_lea.vmem %s3, %s160
      %s162 = smul.u32 2, %s14
      %p163 = scmp.lt.s32.totalorder %s162, 7
      %s164 = scalar_select %p163, %s162, 7
      %s165 = smul.addr %s164, 8
      %s166 = scalar_lea.vmem %s0, %s165
      %s167 = smul.u32 2, %s14
      %s168 = smul.u32 2, %s14
      %p169 = scmp.lt.s32.totalorder %s168, 7
      %s170 = scalar_select %p169, %s168, 7
      %s171 = smul.addr %s170, 4
      %s172 = scalar_lea.vmem %s3, %s171
      %s173 = smul.u32 2, %s14
      %v174 = vld [vmem:[%s166] sm:$0xff]
      %v175 = vld [vmem:[%s166 + $0x8] sm:$0xff]
      %v176 = vld [vmem:[%s1] sm:$0xff]
      %178 = vset.pattern.permute.xlu0 0
      %179 = vperm.xlu0 %178, %v176
      %v180 = vpop.permute.xlu0 %179
      %v182 = vmul.f32 %v174, %v180
      %v183 = vmul.f32 %v175, %v180
      %v184 = vld [vmem:[%s2] sm:$0xff]
      %186 = vset.pattern.permute.xlu0 0
      %187 = vperm.xlu0 %186, %v184
      %v188 = vpop.permute.xlu0 %187
      %v190 = vadd.f32 %v182, %v188
      %v191 = vadd.f32 %v183, %v188
      %v192 = vmax.f32 %v190, 0.0
      %v193 = vmax.f32 %v191, 0.0
      %v194 = vpack.c.bf16 %v192, %v192
      %v195 = vpack.c.bf16 %v193, %v193
      %v198 = vunpack.c.l.b16 %v194
      %v199 = vunpack.c.l.b16 %v195
      %v200 = vpack.c.b16 %v199, %v198
      %202 = vst [vmem:[%s172] sm:$0xff] %v200
      %s203 = smul.u32 2, %s14
      %p204 = scmp.lt.s32.totalorder %s203, 7
      %s205 = scalar_select %p204, %s203, 7
      %s206 = smul.addr %s205, 4
      %s207 = scalar_lea.vmem %s3, %s206
      // Predicated region
      $region33: #{down_transition_forward.7} parent=31 // pred_check
        %p208 = pneg %p100
      $region34: #{down_transition_forward.7} parent=31 // pred_check_branch
        %210 = sbr.rel (%p208) target = $region36
      $region35: #{down_transition_forward.7} parent=31 // pred_region
        %s211 = smul.u32 2, %s14
      $region36: #{down_transition_forward.7} parent=31 // pred_fallthru
        _
    $region32: #{down_transition_forward.7} parent=5 // pred_fallthru
      _
    %p212 = scmp.le.s32.totalorder 2, %s9
    // Predicated region
    $region37: #{down_transition_forward.7} parent=5 // pred_check
      %p213 = pneg %p212
    $region38: #{down_transition_forward.7} parent=5 // pred_check_branch
      %215 = sbr.rel (%p213) target = $region40
    $region39: #{down_transition_forward.7} parent=5 // pred_region
      %s216 = ssub.s32 %s9, 2
      // Predicated region
      $region41: #{down_transition_forward.7} parent=39 // pred_check
        %p217 = pneg %p106
      $region42: #{down_transition_forward.7} parent=39 // pred_check_branch
        %219 = sbr.rel (%p217) target = $region44
      $region43: #{down_transition_forward.7} parent=39 // pred_region
        %s220 = smul.u32 2, %s15
        %p221 = scmp.lt.s32.totalorder %s220, 7
        %s222 = scalar_select %p221, %s220, 7
        %s223 = smul.addr %s222, 4
        %s224 = scalar_lea.vmem %s3, %s223
      $region44: #{down_transition_forward.7} parent=39 // pred_fallthru
        _
    $region40: #{down_transition_forward.7} parent=5 // pred_fallthru
      _
  $region6: #{down_transition_forward.7} parent=0 // loop_footer
    %s13 = sadd.s32 1, %s9
  $region7: #{down_transition_forward.7} parent=0 // loop_footer_branch
    %8 = sbr.rel target = $region3
  $region8: #{down_transition_forward.7} parent=0 // loop_exit
    _

// kernel: down_transition_forward.8
$region0: #{down_transition_forward.8}
  #allocation0 [shape = 'u32[]', space=smem, size = 0x4, offset = 0x4, fixed_abs, tag = 'smem constant byte address 0x4 - core index']
  #allocation1 [shape = 'u32[144,128]{1,0:T(1,128)}', space=vmem, size = 0x12000, scoped, tag = 'internal scratch']
  %s0 = inlined_call_operand.vmem [shape: bf16[8,216], index: 0, kind: input, shape index: {}]
  %s1 = inlined_call_operand.vmem [shape: bf16[216,1024], index: 1, kind: input, shape index: {}]
  %s2 = inlined_call_operand.vmem [shape: f32[8,1024], index: 2, kind: output, shape index: {0}]
  %s3 = inlined_call_operand.vmem [shape: f32[8,1], index: 3, kind: output, shape index: {1}]
  %s4 = inlined_call_operand.vmem [shape: f32[8,1], index: 4, kind: output, shape index: {2}]
  %5 = xla_tuple %s2, %s3, %s4
  %s6 = sld [smem:[#allocation0]]
  $region99: #{down_transition_forward.8} parent=0
    _
  %s8 = ssub.s32 1, %s6
  %s9 = scalar_select 0, %s8, %s6
  $region1: #{down_transition_forward.8} parent=0
    #allocation2 [shape = 'u8[221184]{0}', space=vmem, size = 0x36000, scoped, tag = 'input window, operand 1']
    loop: start=0, step=1, limit=6
    $region2: #{down_transition_forward.8} parent=1 // loop_pre_header
      _
    $region3: #{down_transition_forward.8} parent=1 // loop_header
      %s11 = sphi 0, %s15
      %p12 = scmp.ge.s32.totalorder %s11, 6
      %s19 = sphi 0, %s19
      %s21 = sphi 0, %s19
      %s22 = sphi 0, %s21
      %s36 = sphi 0, %s22
      %s42 = sphi 0, %s44
      %s45 = sphi 0, %s42
      %s46 = sphi 0, %s45
      %s62 = sphi 0, %s46
      %s68 = sphi 0, %s70
      %s71 = sphi 0, %s68
      %s72 = sphi 0, %s71
      %s88 = sphi 0, %s72
      %s92 = sphi 0, %s92
      %s94 = sphi 0, %s92
      %s95 = sphi 0, %s94
      %s109 = sphi 0, %s95
      %s113 = sphi 0, %s113
      %s115 = sphi 0, %s113
      %s116 = sphi 0, %s115
      %s130 = sphi 0, %s116
    $region4: #{down_transition_forward.8} parent=1 // loop_header_branch
      %14 = sbr.rel (%p12) target = $region8
    $region5: #{down_transition_forward.8} parent=1 // loop_body
      %s16 = ssub.s32 %s11, 1
      %s17 = ssub.s32 %s11, 2
      %s18 = sadd.s32 %s11, 1
      %s20 = sadd.s32 %s19, 1
      %p23 = scmp.eq.s32.totalorder %s11, 3
      %p24 = scmp.ne.s32.totalorder %s19, %s21
      %p25 = scmp.eq.s32.totalorder %s11, 0
      %p26 = por %p24, %p25
      %p27 = scmp.ne.s32.totalorder %s19, %s21
      %p28 = scmp.eq.s32.totalorder %s16, 3
      %p29 = por %p27, %p28
      %p30 = scmp.ne.s32.totalorder %s21, %s22
      %p31 = scmp.eq.s32.totalorder %s16, 0
      %p32 = por %p30, %p31
      %p33 = scmp.ne.s32.totalorder %s21, %s22
      %p34 = scmp.eq.s32.totalorder %s17, 3
      %p35 = por %p33, %p34
      %p37 = scmp.ne.s32.totalorder %s22, %s36
      %p38 = scmp.eq.s32.totalorder %s17, 0
      %p39 = por %p37, %p38
      %s40 = ssub.s32 %s11, %s18
      %p41 = scmp.eq.s32.totalorder %s40, 0
      %s43 = sadd.s32 %s42, 1
      %s44 = scalar_select %p41, %s42, %s43
      %p47 = pneg %p41
      %p48 = scmp.eq.s32.totalorder %s11, 3
      %p49 = por %p47, %p48
      %p50 = scmp.ne.s32.totalorder %s42, %s45
      %p51 = scmp.eq.s32.totalorder %s11, 0
      %p52 = por %p50, %p51
      %p53 = scmp.ne.s32.totalorder %s42, %s45
      %p54 = scmp.eq.s32.totalorder %s16, 3
      %p55 = por %p53, %p54
      %p56 = scmp.ne.s32.totalorder %s45, %s46
      %p57 = scmp.eq.s32.totalorder %s16, 0
      %p58 = por %p56, %p57
      %p59 = scmp.ne.s32.totalorder %s45, %s46
      %p60 = scmp.eq.s32.totalorder %s17, 3
      %p61 = por %p59, %p60
      %p63 = scmp.ne.s32.totalorder %s46, %s62
      %p64 = scmp.eq.s32.totalorder %s17, 0
      %p65 = por %p63, %p64
      %s66 = ssub.s32 %s11, %s18
      %p67 = scmp.eq.s32.totalorder %s66, 0
      %s69 = sadd.s32 %s68, 1
      %s70 = scalar_select %p67, %s68, %s69
      %p73 = pneg %p67
      %p74 = scmp.eq.s32.totalorder %s11, 3
      %p75 = por %p73, %p74
      %p76 = scmp.ne.s32.totalorder %s68, %s71
      %p77 = scmp.eq.s32.totalorder %s11, 0
      %p78 = por %p76, %p77
      %p79 = scmp.ne.s32.totalorder %s68, %s71
      %p80 = scmp.eq.s32.totalorder %s16, 3
      %p81 = por %p79, %p80
      %p82 = scmp.ne.s32.totalorder %s71, %s72
      %p83 = scmp.eq.s32.totalorder %s16, 0
      %p84 = por %p82, %p83
      %p85 = scmp.ne.s32.totalorder %s71, %s72
      %p86 = scmp.eq.s32.totalorder %s17, 3
      %p87 = por %p85, %p86
      %p89 = scmp.ne.s32.totalorder %s72, %s88
      %p90 = scmp.eq.s32.totalorder %s17, 0
      %p91 = por %p89, %p90
      %s93 = sadd.s32 %s92, 1
      %p96 = scmp.eq.s32.totalorder %s11, 3
      %p97 = scmp.ne.s32.totalorder %s92, %s94
      %p98 = scmp.eq.s32.totalorder %s11, 0
      %p99 = por %p97, %p98
      %p100 = scmp.ne.s32.totalorder %s92, %s94
      %p101 = scmp.eq.s32.totalorder %s16, 3
      %p102 = por %p100, %p101
      %p103 = scmp.ne.s32.totalorder %s94, %s95
      %p104 = scmp.eq.s32.totalorder %s16, 0
      %p105 = por %p103, %p104
      %p106 = scmp.ne.s32.totalorder %s94, %s95
      %p107 = scmp.eq.s32.totalorder %s17, 3
      %p108 = por %p106, %p107
      %p110 = scmp.ne.s32.totalorder %s95, %s109
      %p111 = scmp.eq.s32.totalorder %s17, 0
      %p112 = por %p110, %p111
      %s114 = sadd.s32 %s113, 1
      %p117 = scmp.eq.s32.totalorder %s11, 3
      %p118 = scmp.ne.s32.totalorder %s113, %s115
      %p119 = scmp.eq.s32.totalorder %s11, 0
      %p120 = por %p118, %p119
      %p121 = scmp.ne.s32.totalorder %s113, %s115
      %p122 = scmp.eq.s32.totalorder %s16, 3
      %p123 = por %p121, %p122
      %p124 = scmp.ne.s32.totalorder %s115, %s116
      %p125 = scmp.eq.s32.totalorder %s16, 0
      %p126 = por %p124, %p125
      %p127 = scmp.ne.s32.totalorder %s115, %s116
      %p128 = scmp.eq.s32.totalorder %s17, 3
      %p129 = por %p127, %p128
      %p131 = scmp.ne.s32.totalorder %s116, %s130
      %p132 = scmp.eq.s32.totalorder %s17, 0
      %p133 = por %p131, %p132
      %p134 = scmp.le.s32.totalorder 1, %s11
      %p135 = scmp.lt.s32.totalorder %s11, 5
      %p136 = pnand %p134, %p135
      %p137 = pneg %p136
      // Predicated region
      $region9: #{down_transition_forward.8} parent=5 // pred_check
        _
      $region10: #{down_transition_forward.8} parent=5 // pred_check_branch
        %139 = sbr.rel (%p136) target = $region12
      $region11: #{down_transition_forward.8} parent=5 // pred_region
        %s140 = ssub.s32 %s11, 1
        // Predicated region
        $region13: #{down_transition_forward.8} parent=11 // pred_check
          %p141 = pneg %p32
        $region14: #{down_transition_forward.8} parent=11 // pred_check_branch
          %143 = sbr.rel (%p141) target = $region16
        $region15: #{down_transition_forward.8} parent=11 // pred_region
          _
        $region16: #{down_transition_forward.8} parent=11 // pred_fallthru
          _
      $region12: #{down_transition_forward.8} parent=5 // pred_fallthru
        _
      %p144 = scmp.lt.s32.totalorder %s11, 4
      // Predicated region
      $region17: #{down_transition_forward.8} parent=5 // pred_check
        %p145 = pneg %p144
      $region18: #{down_transition_forward.8} parent=5 // pred_check_branch
        %147 = sbr.rel (%p145) target = $region20
      $region19: #{down_transition_forward.8} parent=5 // pred_region
        // Predicated region
        $region21: #{down_transition_forward.8} parent=19 // pred_check
          %p148 = pneg %p52
        $region22: #{down_transition_forward.8} parent=19 // pred_check_branch
          %150 = sbr.rel (%p148) target = $region24
        $region23: #{down_transition_forward.8} parent=19 // pred_region
          %s151 = sand.u32 %s42, 1
          %s152 = sand.u32 %s42, 1
          %s153 = smul.addr %s152, 216
          %s154 = scalar_lea.vmem [#allocation2], %s153
          %s155 = smul.u32 2, %s11
          %s156 = smul.addr %s155, 4
          %s157 = scalar_lea.vmem %s1, %s156
          // Predicated region
          $region25: #{down_transition_forward.8} parent=23 // pred_check
            _
          $region26: #{down_transition_forward.8} parent=23 // pred_check_branch
            %159 = sbr.rel (0) target = $region28
          $region27: #{down_transition_forward.8} parent=23 // pred_region
            // Predicated region
            $region29: #{down_transition_forward.8} parent=27 // pred_check
              _
            $region30: #{down_transition_forward.8} parent=27 // pred_check_branch
              %161 = sbr.rel (0) target = $region32
            $region31: #{down_transition_forward.8} parent=27 // pred_region
              // Predicated region
              $region44: #{down_transition_forward.8} parent=31 // pred_check
                _
              $region45: #{down_transition_forward.8} parent=31 // pred_check_branch
                %229 = sbr.rel (0) target = $region47
              $region46: #{down_transition_forward.8} parent=31 // pred_region
                loop: start=0, step=1, limit=1
                $region48: #{down_transition_forward.8} parent=46 // loop_pre_header
                  _
                $region49: #{down_transition_forward.8} parent=46 // loop_header
                  %s231 = sphi 0, %s235
                  %p232 = scmp.ge.s32.totalorder %s231, 1
                  %s236 = sphi %s157, %s157
                  %s237 = sphi %s154, %s154
                $region50: #{down_transition_forward.8} parent=46 // loop_header_branch
                  %234 = sbr.rel (%p232) target = $region54
                $region51: #{down_transition_forward.8} parent=46 // loop_body
                  %v238 = vld [vmem:[%s236] sm:$0xff]
                  %239 = vst [vmem:[%s237] sm:$0xff] %v238
                  %v240 = vld [vmem:[%s236 + $0x20] sm:$0xff]
                  %241 = vst [vmem:[%s237 + $0x8] sm:$0xff] %v240
                  %v242 = vld [vmem:[%s236 + $0x40] sm:$0xff]
                  %243 = vst [vmem:[%s237 + $0x10] sm:$0xff] %v242
                  %v244 = vld [vmem:[%s236 + $0x60] sm:$0xff]
                  %245 = vst [vmem:[%s237 + $0x18] sm:$0xff] %v244
                  %v246 = vld [vmem:[%s236 + $0x80] sm:$0xff]
                  %247 = vst [vmem:[%s237 + $0x20] sm:$0xff] %v246
                  %v248 = vld [vmem:[%s236 + $0xa0] sm:$0xff]
                  %249 = vst [vmem:[%s237 + $0x28] sm:$0xff] %v248
                  %v250 = vld [vmem:[%s236 + $0xc0] sm:$0xff]
                  %251 = vst [vmem:[%s237 + $0x30] sm:$0xff] %v250
                  %v252 = vld [vmem:[%s236 + $0xe0] sm:$0xff]
                  %253 = vst [vmem:[%s237 + $0x38] sm:$0xff] %v252
                  %v254 = vld [vmem:[%s236 + $0x100] sm:$0xff]
                  %255 = vst [vmem:[%s237 + $0x40] sm:$0xff] %v254
                  %v256 = vld [vmem:[%s236 + $0x120] sm:$0xff]
                  %257 = vst [vmem:[%s237 + $0x48] sm:$0xff] %v256
                  %v258 = vld [vmem:[%s236 + $0x140] sm:$0xff]
                  %259 = vst [vmem:[%s237 + $0x50] sm:$0xff] %v258
                  %v260 = vld [vmem:[%s236 + $0x160] sm:$0xff]
                  %261 = vst [vmem:[%s237 + $0x58] sm:$0xff] %v260
                  %v262 = vld [vmem:[%s236 + $0x180] sm:$0xff]
                  %263 = vst [vmem:[%s237 + $0x60] sm:$0xff] %v262
                  %v264 = vld [vmem:[%s236 + $0x1a0] sm:$0xff]
                  %265 = vst [vmem:[%s237 + $0x68] sm:$0xff] %v264
                  %v266 = vld [vmem:[%s236 + $0x1c0] sm:$0xff]
                  %267 = vst [vmem:[%s237 + $0x70] sm:$0xff] %v266
                  %v268 = vld [vmem:[%s236 + $0x1e0] sm:$0xff]
                  %269 = vst [vmem:[%s237 + $0x78] sm:$0xff] %v268
                  %v270 = vld [vmem:[%s236 + $0x200] sm:$0xff]
                  %271 = vst [vmem:[%s237 + $0x80] sm:$0xff] %v270
                  %v272 = vld [vmem:[%s236 + $0x220] sm:$0xff]
                  %273 = vst [vmem:[%s237 + $0x88] sm:$0xff] %v272
                  %v274 = vld [vmem:[%s236 + $0x240] sm:$0xff]
                  %275 = vst [vmem:[%s237 + $0x90] sm:$0xff] %v274
                  %v276 = vld [vmem:[%s236 + $0x260] sm:$0xff]
                  %277 = vst [vmem:[%s237 + $0x98] sm:$0xff] %v276
                  %v278 = vld [vmem:[%s236 + $0x280] sm:$0xff]
                  %279 = vst [vmem:[%s237 + $0xa0] sm:$0xff] %v278
                  %v280 = vld [vmem:[%s236 + $0x2a0] sm:$0xff]
                  %281 = vst [vmem:[%s237 + $0xa8] sm:$0xff] %v280
                  %v282 = vld [vmem:[%s236 + $0x2c0] sm:$0xff]
                  %283 = vst [vmem:[%s237 + $0xb0] sm:$0xff] %v282
                  %v284 = vld [vmem:[%s236 + $0x2e0] sm:$0xff]
                  %285 = vst [vmem:[%s237 + $0xb8] sm:$0xff] %v284
                  %v286 = vld [vmem:[%s236 + $0x300] sm:$0xff]
                  %287 = vst [vmem:[%s237 + $0xc0] sm:$0xff] %v286
                  %v288 = vld [vmem:[%s236 + $0x320] sm:$0xff]
                  %289 = vst [vmem:[%s237 + $0xc8] sm:$0xff] %v288
                  %v290 = vld [vmem:[%s236 + $0x340] sm:$0xff]
                  %291 = vst [vmem:[%s237 + $0xd0] sm:$0xff] %v290
                $region52: #{down_transition_forward.8} parent=46 // loop_footer
                  %s235 = sadd.s32 1, %s231
                $region53: #{down_transition_forward.8} parent=46 // loop_footer_branch
                  %230 = sbr.rel target = $region49
                $region54: #{down_transition_forward.8} parent=46 // loop_exit
                  _
              $region47: #{down_transition_forward.8} parent=31 // pred_fallthru
                _
              // Predicated region
              $region55: #{down_transition_forward.8} parent=31 // pred_check
                _
              $region56: #{down_transition_forward.8} parent=31 // pred_check_branch
                %293 = sbr.rel target = $region58
              $region57: #{down_transition_forward.8} parent=31 // pred_region
                _
              $region58: #{down_transition_forward.8} parent=31 // pred_fallthru
                _
            $region32: #{down_transition_forward.8} parent=27 // pred_fallthru
              _
            // Predicated region
            $region33: #{down_transition_forward.8} parent=27 // pred_check
              _
            $region34: #{down_transition_forward.8} parent=27 // pred_check_branch
              %163 = sbr.rel target = $region36
            $region35: #{down_transition_forward.8} parent=27 // pred_region
              %s165 = ssub.s32 256, 1
              loop: start=0, step=1, limit=1
              $region37: #{down_transition_forward.8} parent=35 // loop_pre_header
                _
              $region38: #{down_transition_forward.8} parent=35 // loop_header
                %s167 = sphi 0, %s171
                %p168 = scmp.ge.s32.totalorder %s167, 1
                %s172 = sphi %s157, %s157
                %s173 = sphi %s154, %s154
              $region39: #{down_transition_forward.8} parent=35 // loop_header_branch
                %170 = sbr.rel (%p168) target = $region43
              $region40: #{down_transition_forward.8} parent=35 // loop_body
                %v174 = vld [vmem:[%s172] sm:%s165]
                %175 = vst [vmem:[%s173] sm:%s165] %v174
                %v176 = vld [vmem:[%s172 + $0x20] sm:%s165]
                %177 = vst [vmem:[%s173 + $0x8] sm:%s165] %v176
                %v178 = vld [vmem:[%s172 + $0x40] sm:%s165]
                %179 = vst [vmem:[%s173 + $0x10] sm:%s165] %v178
                %v180 = vld [vmem:[%s172 + $0x60] sm:%s165]
                %181 = vst [vmem:[%s173 + $0x18] sm:%s165] %v180
                %v182 = vld [vmem:[%s172 + $0x80] sm:%s165]
                %183 = vst [vmem:[%s173 + $0x20] sm:%s165] %v182
                %v184 = vld [vmem:[%s172 + $0xa0] sm:%s165]
                %185 = vst [vmem:[%s173 + $0x28] sm:%s165] %v184
                %v186 = vld [vmem:[%s172 + $0xc0] sm:%s165]
                %187 = vst [vmem:[%s173 + $0x30] sm:%s165] %v186
                %v188 = vld [vmem:[%s172 + $0xe0] sm:%s165]
                %189 = vst [vmem:[%s173 + $0x38] sm:%s165] %v188
                %v190 = vld [vmem:[%s172 + $0x100] sm:%s165]
                %191 = vst [vmem:[%s173 + $0x40] sm:%s165] %v190
                %v192 = vld [vmem:[%s172 + $0x120] sm:%s165]
                %193 = vst [vmem:[%s173 + $0x48] sm:%s165] %v192
                %v194 = vld [vmem:[%s172 + $0x140] sm:%s165]
                %195 = vst [vmem:[%s173 + $0x50] sm:%s165] %v194
                %v196 = vld [vmem:[%s172 + $0x160] sm:%s165]
                %197 = vst [vmem:[%s173 + $0x58] sm:%s165] %v196
                %v198 = vld [vmem:[%s172 + $0x180] sm:%s165]
                %199 = vst [vmem:[%s173 + $0x60] sm:%s165] %v198
                %v200 = vld [vmem:[%s172 + $0x1a0] sm:%s165]
                %201 = vst [vmem:[%s173 + $0x68] sm:%s165] %v200
                %v202 = vld [vmem:[%s172 + $0x1c0] sm:%s165]
                %203 = vst [vmem:[%s173 + $0x70] sm:%s165] %v202
                %v204 = vld [vmem:[%s172 + $0x1e0] sm:%s165]
                %205 = vst [vmem:[%s173 + $0x78] sm:%s165] %v204
                %v206 = vld [vmem:[%s172 + $0x200] sm:%s165]
                %207 = vst [vmem:[%s173 + $0x80] sm:%s165] %v206
                %v208 = vld [vmem:[%s172 + $0x220] sm:%s165]
                %209 = vst [vmem:[%s173 + $0x88] sm:%s165] %v208
                %v210 = vld [vmem:[%s172 + $0x240] sm:%s165]
                %211 = vst [vmem:[%s173 + $0x90] sm:%s165] %v210
                %v212 = vld [vmem:[%s172 + $0x260] sm:%s165]
                %213 = vst [vmem:[%s173 + $0x98] sm:%s165] %v212
                %v214 = vld [vmem:[%s172 + $0x280] sm:%s165]
                %215 = vst [vmem:[%s173 + $0xa0] sm:%s165] %v214
                %v216 = vld [vmem:[%s172 + $0x2a0] sm:%s165]
                %217 = vst [vmem:[%s173 + $0xa8] sm:%s165] %v216
                %v218 = vld [vmem:[%s172 + $0x2c0] sm:%s165]
                %219 = vst [vmem:[%s173 + $0xb0] sm:%s165] %v218
                %v220 = vld [vmem:[%s172 + $0x2e0] sm:%s165]
                %221 = vst [vmem:[%s173 + $0xb8] sm:%s165] %v220
                %v222 = vld [vmem:[%s172 + $0x300] sm:%s165]
                %223 = vst [vmem:[%s173 + $0xc0] sm:%s165] %v222
                %v224 = vld [vmem:[%s172 + $0x320] sm:%s165]
                %225 = vst [vmem:[%s173 + $0xc8] sm:%s165] %v224
                %v226 = vld [vmem:[%s172 + $0x340] sm:%s165]
                %227 = vst [vmem:[%s173 + $0xd0] sm:%s165] %v226
              $region41: #{down_transition_forward.8} parent=35 // loop_footer
                %s171 = sadd.s32 1, %s167
              $region42: #{down_transition_forward.8} parent=35 // loop_footer_branch
                %166 = sbr.rel target = $region38
              $region43: #{down_transition_forward.8} parent=35 // loop_exit
                _
            $region36: #{down_transition_forward.8} parent=27 // pred_fallthru
              _
          $region28: #{down_transition_forward.8} parent=23 // pred_fallthru
            _
          %294 = vnop
        $region24: #{down_transition_forward.8} parent=19 // pred_fallthru
          _
      $region20: #{down_transition_forward.8} parent=5 // pred_fallthru
        _
      %p295 = scmp.le.s32.totalorder 1, %s11
      %p296 = scmp.lt.s32.totalorder %s11, 5
      %p297 = pnand %p295, %p296
      %p298 = pneg %p297
      // Predicated region
      $region59: #{down_transition_forward.8} parent=5 // pred_check
        _
      $region60: #{down_transition_forward.8} parent=5 // pred_check_branch
        %300 = sbr.rel (%p297) target = $region62
      $region61: #{down_transition_forward.8} parent=5 // pred_region
        %s301 = ssub.s32 %s11, 1
        %s302 = sand.u32 %s45, 1
        %s303 = sand.u32 %s45, 1
        %s304 = smul.addr %s303, 216
        %s305 = scalar_lea.vmem [#allocation2], %s304
        // Predicated region
        $region63: #{down_transition_forward.8} parent=61 // pred_check
          %p306 = pneg %p58
        $region64: #{down_transition_forward.8} parent=61 // pred_check_branch
          %308 = sbr.rel (%p306) target = $region66
        $region65: #{down_transition_forward.8} parent=61 // pred_region
          _
        $region66: #{down_transition_forward.8} parent=61 // pred_fallthru
          _
        %p309 = pneg %p32
        %p310 = pneg %p29
        %s311 = sand.u32 %s45, 1
        %s312 = sand.u32 %s45, 1
        %s313 = smul.addr %s312, 216
        %s314 = scalar_lea.vmem [#allocation2], %s313
        %p315 = pneg %p58
        %p316 = pneg %p55
        %p317 = pneg %p84
        %p318 = pneg %p81
        %s319 = smul.u32 2, %s16
        %p320 = scmp.lt.s32.totalorder %s319, 7
        %s321 = scalar_select %p320, %s319, 7
        %s322 = smul.addr %s321, 8
        %s323 = scalar_lea.vmem %s2, %s322
        %p324 = pneg %p105
        %p325 = pneg %p102
        %p326 = pneg %p126
        %p327 = pneg %p123
        %s328 = smul.u32 2, %s16
        %s329 = smul.u32 2, %s16
        %p330 = scmp.lt.s32.totalorder %s329, 7
        %s331 = scalar_select %p330, %s329, 7
        %s332 = smul.addr %s331, 8
        %s333 = scalar_lea.vmem %s2, %s332
        %s334 = smul.u32 2, %s16
        %v336 = vld [vmem:[%s0] sm:$0xff]
        %v337 = vld [vmem:[%s305] sm:$0xff]
        %v338 = vld [vmem:[%s305 + $0x8] sm:$0xff]
        %v339 = vld [vmem:[%s305 + $0x10] sm:$0xff]
        %v340 = vld [vmem:[%s305 + $0x18] sm:$0xff]
        %v341 = vld [vmem:[%s305 + $0x20] sm:$0xff]
        %v342 = vld [vmem:[%s305 + $0x28] sm:$0xff]
        %v343 = vld [vmem:[%s305 + $0x30] sm:$0xff]
        %v344 = vld [vmem:[%s305 + $0x38] sm:$0xff]
        %v345 = vld [vmem:[%s305 + $0x40] sm:$0xff]
        %v346 = vld [vmem:[%s305 + $0x48] sm:$0xff]
        %v347 = vld [vmem:[%s305 + $0x50] sm:$0xff]
        %v348 = vld [vmem:[%s305 + $0x58] sm:$0xff]
        %v349 = vld [vmem:[%s305 + $0x60] sm:$0xff]
        %v350 = vld [vmem:[%s305 + $0x68] sm:$0xff]
        %v351 = vld [vmem:[%s305 + $0x70] sm:$0xff]
        %v352 = vld [vmem:[%s305 + $0x78] sm:$0xff]
        %v353 = vld [vmem:[%s305 + $0x80] sm:$0xff]
        %v354 = vld [vmem:[%s305 + $0x88] sm:$0xff]
        %v355 = vld [vmem:[%s305 + $0x90] sm:$0xff]
        %v356 = vld [vmem:[%s305 + $0x98] sm:$0xff]
        %v357 = vld [vmem:[%s305 + $0xa0] sm:$0xff]
        %v358 = vld [vmem:[%s305 + $0xa8] sm:$0xff]
        %v359 = vld [vmem:[%s305 + $0xb0] sm:$0xff]
        %v360 = vld [vmem:[%s305 + $0xb8] sm:$0xff]
        %v361 = vld [vmem:[%s305 + $0xc0] sm:$0xff]
        %v362 = vld [vmem:[%s305 + $0xc8] sm:$0xff]
        %v363 = vld [vmem:[%s305 + $0xd0] sm:$0xff]
        %v365 = vunpack.c.l.b16 %v336
        %v366 = vunpack.c.h.b16 %v336
        %v367 = vpack.c.b16 %v365, %v365
        %v368 = vpack.c.b16 %v366, %v366
        %v397 = vunpack.c.l.b16 %v337
        %v398 = vunpack.c.h.b16 %v337
        %v399 = vunpack.c.l.b16 %v338
        %v400 = vunpack.c.h.b16 %v338
        %v401 = vunpack.c.l.b16 %v339
        %v402 = vunpack.c.h.b16 %v339
        %v403 = vunpack.c.l.b16 %v340
        %v404 = vunpack.c.h.b16 %v340
        %v405 = vunpack.c.l.b16 %v341
        %v406 = vunpack.c.h.b16 %v341
        %v407 = vunpack.c.l.b16 %v342
        %v408 = vunpack.c.h.b16 %v342
        %v409 = vunpack.c.l.b16 %v343
        %v410 = vunpack.c.h.b16 %v343
        %v411 = vunpack.c.l.b16 %v344
        %v412 = vunpack.c.h.b16 %v344
        %v413 = vunpack.c.l.b16 %v345
        %v414 = vunpack.c.h.b16 %v345
        %v415 = vunpack.c.l.b16 %v346
        %v416 = vunpack.c.h.b16 %v346
        %v417 = vunpack.c.l.b16 %v347
        %v418 = vunpack.c.h.b16 %v347
        %v419 = vunpack.c.l.b16 %v348
        %v420 = vunpack.c.h.b16 %v348
        %v421 = vunpack.c.l.b16 %v349
        %v422 = vunpack.c.h.b16 %v349
        %v423 = vunpack.c.l.b16 %v350
        %v424 = vunpack.c.h.b16 %v350
        %v425 = vunpack.c.l.b16 %v351
        %v426 = vunpack.c.h.b16 %v351
        %v427 = vunpack.c.l.b16 %v352
        %v428 = vunpack.c.h.b16 %v352
        %v429 = vunpack.c.l.b16 %v353
        %v430 = vunpack.c.h.b16 %v353
        %v431 = vunpack.c.l.b16 %v354
        %v432 = vunpack.c.h.b16 %v354
        %v433 = vunpack.c.l.b16 %v355
        %v434 = vunpack.c.h.b16 %v355
        %v435 = vunpack.c.l.b16 %v356
        %v436 = vunpack.c.h.b16 %v356
        %v437 = vunpack.c.l.b16 %v357
        %v438 = vunpack.c.h.b16 %v357
        %v439 = vunpack.c.l.b16 %v358
        %v440 = vunpack.c.h.b16 %v358
        %v441 = vunpack.c.l.b16 %v359
        %v442 = vunpack.c.h.b16 %v359
        %v443 = vunpack.c.l.b16 %v360
        %v444 = vunpack.c.h.b16 %v360
        %v445 = vunpack.c.l.b16 %v361
        %v446 = vunpack.c.h.b16 %v361
        %v447 = vunpack.c.l.b16 %v362
        %v448 = vunpack.c.h.b16 %v362
        %v449 = vunpack.c.l.b16 %v363
        %v450 = vunpack.c.h.b16 %v363
        %v451 = vpack.c.b16 %v399, %v397
        %v452 = vpack.c.b16 %v400, %v398
        %v453 = vpack.c.b16 %v403, %v401
        %v454 = vpack.c.b16 %v404, %v402
        %v455 = vpack.c.b16 %v407, %v405
        %v456 = vpack.c.b16 %v408, %v406
        %v457 = vpack.c.b16 %v411, %v409
        %v458 = vpack.c.b16 %v412, %v410
        %v459 = vpack.c.b16 %v415, %v413
        %v460 = vpack.c.b16 %v416, %v414
        %v461 = vpack.c.b16 %v419, %v417
        %v462 = vpack.c.b16 %v420, %v418
        %v463 = vpack.c.b16 %v423, %v421
        %v464 = vpack.c.b16 %v424, %v422
        %v465 = vpack.c.b16 %v427, %v425
        %v466 = vpack.c.b16 %v428, %v426
        %v467 = vpack.c.b16 %v431, %v429
        %v468 = vpack.c.b16 %v432, %v430
        %v469 = vpack.c.b16 %v435, %v433
        %v470 = vpack.c.b16 %v436, %v434
        %v471 = vpack.c.b16 %v439, %v437
        %v472 = vpack.c.b16 %v440, %v438
        %v473 = vpack.c.b16 %v443, %v441
        %v474 = vpack.c.b16 %v444, %v442
        %v475 = vpack.c.b16 %v447, %v445
        %v476 = vpack.c.b16 %v448, %v446
        %v477 = vpack.c.b16 %v449, %v449
        %v478 = vpack.c.b16 %v450, %v450
        %vm505 = vcmask 719872
        %v507 = vsel %vm505, %v368, 0
        %vm509 = vcmask 1043456
        %v511 = vsel %vm509, %v477, 0
        %v514 = vsel %vm509, %v478, 0
        %516 = vmatprep.subr.bf16.mxu0 %v466
        %517 = vmatpush1.bf16.msra.mxu0 %v465
        %518 = vmatprep.subr.bf16.mxu0 %v464
        %519 = vmatpush1.bf16.msra.mxu0 %v463
        %520 = vmatprep.subr.bf16.mxu0 %v462
        %521 = vmatpush1.bf16.msra.mxu0 %v461
        %522 = vmatprep.subr.bf16.mxu0 %v460
        %523 = vmatpush1.bf16.msra.mxu0 %v459
        %524 = vmatprep.subr.bf16.mxu0 %v458
        %525 = vmatpush1.bf16.msra.mxu0 %v457
        %526 = vmatprep.subr.bf16.mxu0 %v456
        %527 = vmatpush1.bf16.msra.mxu0 %v455
        %528 = vmatprep.subr.bf16.mxu0 %v454
        %529 = vmatpush1.bf16.msra.mxu0 %v453
        %530 = vmatprep.subr.bf16.mxu0 %v452
        %531 = vmatpush1.bf16.msra.mxu0 %v451
        %532 = vmatprep.subr.bf16.mxu0 0
        %533 = vmatpush2.bf16.msra.mxu0 0
        %534 = vmatprep.subr.bf16.mxu0 0
        %535 = vmatpush2.bf16.msra.mxu0 0
        %536 = vmatprep.subr.bf16.mxu0 %v514
        %537 = vmatpush2.bf16.msra.mxu0 %v511
        %538 = vmatprep.subr.bf16.mxu0 %v476
        %539 = vmatpush2.bf16.msra.mxu0 %v475
        %540 = vmatprep.subr.bf16.mxu0 %v474
        %541 = vmatpush2.bf16.msra.mxu0 %v473
        %542 = vmatprep.subr.bf16.mxu0 %v472
        %543 = vmatpush2.bf16.msra.mxu0 %v471
        %544 = vmatprep.subr.bf16.mxu0 %v470
        %545 = vmatpush2.bf16.msra.mxu0 %v469
        %546 = vmatprep.subr.bf16.mxu0 %v468
        %547 = vmatpush2.bf16.msra.mxu0 %v467
        %548 = vmatprep.mubr.bf16.mxu0 %v507
        %549 = vmatmul.mubr.bf16.gmra.mxu0 %v367
        %v550 = vpop.f32.mrf.mxu0
        %v551 = vadd.f32 0.0, %v550
        %v552 = vpop.f32.mrf.mxu0
        %v553 = vadd.f32 0.0, %v552
        %v554 = vpop.f32.mrf.mxu0
        %v555 = vpop.f32.mrf.mxu0
        %556 = vdwg.mxu0
        %557 = vst [vmem:[%s333] sm:$0xff] %v551
        %558 = vst [vmem:[%s333 + $0x8] sm:$0xff] %v553
        %p559 = scmp.eq.s32.totalorder %s16, 0
        // Predicated region
        $region67: #{down_transition_forward.8} parent=61 // pred_check
          %p560 = pneg %p559
        $region68: #{down_transition_forward.8} parent=61 // pred_check_branch
          %562 = sbr.rel (%p560) target = $region70
        $region69: #{down_transition_forward.8} parent=61 // pred_region
          %vm563 = vcmask 7168
          %564 = vst.msk [vmem:[%s3] sm:$0xff] %vm563, 0.0
          %565 = vst.msk [vmem:[%s4] sm:$0xff] %vm563, 0.0
        $region70: #{down_transition_forward.8} parent=61 // pred_fallthru
          _
        %v566 = vld [vmem:[%s3] sm:$0xff]
        %v567 = vadd.f32 %v551, %v553
        %568 = vadd.xlane.f32.xlu0 %v567
        %v569 = vpop.xlane.xlu0 %568
        %v570 = vadd.f32 %v566, %v569
        %vm571 = vcmask 7168
        %572 = vst.msk [vmem:[%s3] sm:$0xff] %vm571, %v570
        %v573 = vld [vmem:[%s4] sm:$0xff]
        %v574 = vmul.f32 %v551, %v551
        %v575 = vmul.f32 %v553, %v553
        %v576 = vadd.f32 %v574, %v575
        %577 = vadd.xlane.f32.xlu0 %v576
        %v578 = vpop.xlane.xlu0 %577
        %v579 = vadd.f32 %v573, %v578
        %580 = vst.msk [vmem:[%s4] sm:$0xff] %vm571, %v579
        %s581 = smul.u32 2, %s16
        %p582 = scmp.lt.s32.totalorder %s581, 7
        %s583 = scalar_select %p582, %s581, 7
        %s584 = smul.addr %s583, 8
        %s585 = scalar_lea.vmem %s2, %s584
        // Predicated region
        $region71: #{down_transition_forward.8} parent=61 // pred_check
          %p586 = pneg %p81
        $region72: #{down_transition_forward.8} parent=61 // pred_check_branch
          %588 = sbr.rel (%p586) target = $region74
        $region73: #{down_transition_forward.8} parent=61 // pred_region
          %s589 = smul.u32 2, %s16
        $region74: #{down_transition_forward.8} parent=61 // pred_fallthru
          _
        // Predicated region
        $region75: #{down_transition_forward.8} parent=61 // pred_check
          %p590 = pneg %p102
        $region76: #{down_transition_forward.8} parent=61 // pred_check_branch
          %592 = sbr.rel (%p590) target = $region78
        $region77: #{down_transition_forward.8} parent=61 // pred_region
          _
        $region78: #{down_transition_forward.8} parent=61 // pred_fallthru
          _
        // Predicated region
        $region79: #{down_transition_forward.8} parent=61 // pred_check
          %p593 = pneg %p123
        $region80: #{down_transition_forward.8} parent=61 // pred_check_branch
          %595 = sbr.rel (%p593) target = $region82
        $region81: #{down_transition_forward.8} parent=61 // pred_region
          _
        $region82: #{down_transition_forward.8} parent=61 // pred_fallthru
          _
        // Predicated region
        $region83: #{down_transition_forward.8} parent=61 // pred_check
          %p596 = pneg %p102
        $region84: #{down_transition_forward.8} parent=61 // pred_check_branch
          %598 = sbr.rel (%p596) target = $region86
        $region85: #{down_transition_forward.8} parent=61 // pred_region
          _
        $region86: #{down_transition_forward.8} parent=61 // pred_fallthru
          _
        // Predicated region
        $region87: #{down_transition_forward.8} parent=61 // pred_check
          %p599 = pneg %p123
        $region88: #{down_transition_forward.8} parent=61 // pred_check_branch
          %601 = sbr.rel (%p599) target = $region90
        $region89: #{down_transition_forward.8} parent=61 // pred_region
          _
        $region90: #{down_transition_forward.8} parent=61 // pred_fallthru
          _
      $region62: #{down_transition_forward.8} parent=5 // pred_fallthru
        _
      %p602 = scmp.le.s32.totalorder 2, %s11
      // Predicated region
      $region91: #{down_transition_forward.8} parent=5 // pred_check
        %p603 = pneg %p602
      $region92: #{down_transition_forward.8} parent=5 // pred_check_branch
        %605 = sbr.rel (%p603) target = $region94
      $region93: #{down_transition_forward.8} parent=5 // pred_region
        %s606 = ssub.s32 %s11, 2
        // Predicated region
        $region95: #{down_transition_forward.8} parent=93 // pred_check
          %p607 = pneg %p87
        $region96: #{down_transition_forward.8} parent=93 // pred_check_branch
          %609 = sbr.rel (%p607) target = $region98
        $region97: #{down_transition_forward.8} parent=93 // pred_region
          %s610 = smul.u32 2, %s17
          %p611 = scmp.lt.s32.totalorder %s610, 7
          %s612 = scalar_select %p611, %s610, 7
          %s613 = smul.addr %s612, 8
          %s614 = scalar_lea.vmem %s2, %s613
        $region98: #{down_transition_forward.8} parent=93 // pred_fallthru
          _
      $region94: #{down_transition_forward.8} parent=5 // pred_fallthru
        _
    $region6: #{down_transition_forward.8} parent=1 // loop_footer
      %s15 = sadd.s32 1, %s11
    $region7: #{down_transition_forward.8} parent=1 // loop_footer_branch
      %10 = sbr.rel target = $region3
    $region8: #{down_transition_forward.8} parent=1 // loop_exit
      _

// kernel: down_transition_forward.9
$region0: #{down_transition_forward.9}
  #allocation0 [shape = 'u32[]', space=smem, size = 0x4, offset = 0x4, fixed_abs, tag = 'smem constant byte address 0x4 - core index']
  #allocation1 [shape = 'u32[144,128]{1,0:T(1,128)}', space=vmem, size = 0x12000, scoped, tag = 'internal scratch']
  %s0 = inlined_call_operand.vmem [shape: f32[8,1024], index: 0, kind: input, shape index: {}]
  %s1 = inlined_call_operand.vmem [shape: f32[8,1], index: 1, kind: input, shape index: {}]
  %s2 = inlined_call_operand.vmem [shape: f32[8,1], index: 2, kind: input, shape index: {}]
  %s3 = inlined_call_operand.vmem [shape: bf16[8,1024], index: 3, kind: output, shape index: {}]
  %s4 = sld [smem:[#allocation0]]
  $region45: #{down_transition_forward.9} parent=0
    _
  %s6 = ssub.s32 1, %s4
  %s7 = scalar_select 0, %s6, %s4
  loop: start=0, step=1, limit=6
  $region2: #{down_transition_forward.9} parent=0 // loop_pre_header
    _
  $region3: #{down_transition_forward.9} parent=0 // loop_header
    %s9 = sphi 0, %s13
    %p10 = scmp.ge.s32.totalorder %s9, 6
    %s19 = sphi 0, %s21
    %s22 = sphi 0, %s19
    %s23 = sphi 0, %s22
    %s39 = sphi 0, %s23
    %s43 = sphi 0, %s43
    %s45 = sphi 0, %s43
    %s46 = sphi 0, %s45
    %s60 = sphi 0, %s46
    %s64 = sphi 0, %s64
    %s66 = sphi 0, %s64
    %s67 = sphi 0, %s66
    %s81 = sphi 0, %s67
    %s87 = sphi 0, %s89
    %s90 = sphi 0, %s87
    %s91 = sphi 0, %s90
    %s107 = sphi 0, %s91
  $region4: #{down_transition_forward.9} parent=0 // loop_header_branch
    %12 = sbr.rel (%p10) target = $region8
  $region5: #{down_transition_forward.9} parent=0 // loop_body
    %s14 = ssub.s32 %s9, 1
    %s15 = ssub.s32 %s9, 2
    %s16 = sadd.s32 %s9, 1
    %s17 = ssub.s32 %s9, %s16
    %p18 = scmp.eq.s32.totalorder %s17, 0
    %s20 = sadd.s32 %s19, 1
    %s21 = scalar_select %p18, %s19, %s20
    %p24 = pneg %p18
    %p25 = scmp.eq.s32.totalorder %s9, 3
    %p26 = por %p24, %p25
    %p27 = scmp.ne.s32.totalorder %s19, %s22
    %p28 = scmp.eq.s32.totalorder %s9, 0
    %p29 = por %p27, %p28
    %p30 = scmp.ne.s32.totalorder %s19, %s22
    %p31 = scmp.eq.s32.totalorder %s14, 3
    %p32 = por %p30, %p31
    %p33 = scmp.ne.s32.totalorder %s22, %s23
    %p34 = scmp.eq.s32.totalorder %s14, 0
    %p35 = por %p33, %p34
    %p36 = scmp.ne.s32.totalorder %s22, %s23
    %p37 = scmp.eq.s32.totalorder %s15, 3
    %p38 = por %p36, %p37
    %p40 = scmp.ne.s32.totalorder %s23, %s39
    %p41 = scmp.eq.s32.totalorder %s15, 0
    %p42 = por %p40, %p41
    %s44 = sadd.s32 %s43, 1
    %p47 = scmp.eq.s32.totalorder %s9, 3
    %p48 = scmp.ne.s32.totalorder %s43, %s45
    %p49 = scmp.eq.s32.totalorder %s9, 0
    %p50 = por %p48, %p49
    %p51 = scmp.ne.s32.totalorder %s43, %s45
    %p52 = scmp.eq.s32.totalorder %s14, 3
    %p53 = por %p51, %p52
    %p54 = scmp.ne.s32.totalorder %s45, %s46
    %p55 = scmp.eq.s32.totalorder %s14, 0
    %p56 = por %p54, %p55
    %p57 = scmp.ne.s32.totalorder %s45, %s46
    %p58 = scmp.eq.s32.totalorder %s15, 3
    %p59 = por %p57, %p58
    %p61 = scmp.ne.s32.totalorder %s46, %s60
    %p62 = scmp.eq.s32.totalorder %s15, 0
    %p63 = por %p61, %p62
    %s65 = sadd.s32 %s64, 1
    %p68 = scmp.eq.s32.totalorder %s9, 3
    %p69 = scmp.ne.s32.totalorder %s64, %s66
    %p70 = scmp.eq.s32.totalorder %s9, 0
    %p71 = por %p69, %p70
    %p72 = scmp.ne.s32.totalorder %s64, %s66
    %p73 = scmp.eq.s32.totalorder %s14, 3
    %p74 = por %p72, %p73
    %p75 = scmp.ne.s32.totalorder %s66, %s67
    %p76 = scmp.eq.s32.totalorder %s14, 0
    %p77 = por %p75, %p76
    %p78 = scmp.ne.s32.totalorder %s66, %s67
    %p79 = scmp.eq.s32.totalorder %s15, 3
    %p80 = por %p78, %p79
    %p82 = scmp.ne.s32.totalorder %s67, %s81
    %p83 = scmp.eq.s32.totalorder %s15, 0
    %p84 = por %p82, %p83
    %s85 = ssub.s32 %s9, %s16
    %p86 = scmp.eq.s32.totalorder %s85, 0
    %s88 = sadd.s32 %s87, 1
    %s89 = scalar_select %p86, %s87, %s88
    %p92 = pneg %p86
    %p93 = scmp.eq.s32.totalorder %s9, 3
    %p94 = por %p92, %p93
    %p95 = scmp.ne.s32.totalorder %s87, %s90
    %p96 = scmp.eq.s32.totalorder %s9, 0
    %p97 = por %p95, %p96
    %p98 = scmp.ne.s32.totalorder %s87, %s90
    %p99 = scmp.eq.s32.totalorder %s14, 3
    %p100 = por %p98, %p99
    %p101 = scmp.ne.s32.totalorder %s90, %s91
    %p102 = scmp.eq.s32.totalorder %s14, 0
    %p103 = por %p101, %p102
    %p104 = scmp.ne.s32.totalorder %s90, %s91
    %p105 = scmp.eq.s32.totalorder %s15, 3
    %p106 = por %p104, %p105
    %p108 = scmp.ne.s32.totalorder %s91, %s107
    %p109 = scmp.eq.s32.totalorder %s15, 0
    %p110 = por %p108, %p109
    %p111 = scmp.le.s32.totalorder 1, %s9
    %p112 = scmp.lt.s32.totalorder %s9, 5
    %p113 = pnand %p111, %p112
    %p114 = pneg %p113
    // Predicated region
    $region9: #{down_transition_forward.9} parent=5 // pred_check
      _
    $region10: #{down_transition_forward.9} parent=5 // pred_check_branch
      %116 = sbr.rel (%p113) target = $region12
    $region11: #{down_transition_forward.9} parent=5 // pred_region
      %s117 = ssub.s32 %s9, 1
      // Predicated region
      $region13: #{down_transition_forward.9} parent=11 // pred_check
        %p118 = pneg %p56
      $region14: #{down_transition_forward.9} parent=11 // pred_check_branch
        %120 = sbr.rel (%p118) target = $region16
      $region15: #{down_transition_forward.9} parent=11 // pred_region
        _
      $region16: #{down_transition_forward.9} parent=11 // pred_fallthru
        _
      // Predicated region
      $region17: #{down_transition_forward.9} parent=11 // pred_check
        %p121 = pneg %p77
      $region18: #{down_transition_forward.9} parent=11 // pred_check_branch
        %123 = sbr.rel (%p121) target = $region20
      $region19: #{down_transition_forward.9} parent=11 // pred_region
        _
      $region20: #{down_transition_forward.9} parent=11 // pred_fallthru
        _
    $region12: #{down_transition_forward.9} parent=5 // pred_fallthru
      _
    %p124 = scmp.lt.s32.totalorder %s9, 4
    // Predicated region
    $region21: #{down_transition_forward.9} parent=5 // pred_check
      %p125 = pneg %p124
    $region22: #{down_transition_forward.9} parent=5 // pred_check_branch
      %127 = sbr.rel (%p125) target = $region24
    $region23: #{down_transition_forward.9} parent=5 // pred_region
      // Predicated region
      $region25: #{down_transition_forward.9} parent=23 // pred_check
        %p128 = pneg %p29
      $region26: #{down_transition_forward.9} parent=23 // pred_check_branch
        %130 = sbr.rel (%p128) target = $region28
      $region27: #{down_transition_forward.9} parent=23 // pred_region
        %s131 = smul.u32 2, %s9
        %p132 = scmp.lt.s32.totalorder %s131, 7
        %s133 = scalar_select %p132, %s131, 7
        %s134 = smul.addr %s133, 8
        %s135 = scalar_lea.vmem %s0, %s134
        %s136 = smul.u32 2, %s9
      $region28: #{down_transition_forward.9} parent=23 // pred_fallthru
        _
    $region24: #{down_transition_forward.9} parent=5 // pred_fallthru
      _
    %p137 = scmp.le.s32.totalorder 1, %s9
    %p138 = scmp.lt.s32.totalorder %s9, 5
    %p139 = pnand %p137, %p138
    %p140 = pneg %p139
    // Predicated region
    $region29: #{down_transition_forward.9} parent=5 // pred_check
      _
    $region30: #{down_transition_forward.9} parent=5 // pred_check_branch
      %142 = sbr.rel (%p139) target = $region32
    $region31: #{down_transition_forward.9} parent=5 // pred_region
      %s143 = ssub.s32 %s9, 1
      %s144 = smul.u32 2, %s14
      %p145 = scmp.lt.s32.totalorder %s144, 7
      %s146 = scalar_select %p145, %s144, 7
      %s147 = smul.addr %s146, 8
      %s148 = scalar_lea.vmem %s0, %s147
      %p149 = pneg %p35
      %p150 = pneg %p32
      %p151 = pneg %p56
      %p152 = pneg %p53
      %p153 = pneg %p77
      %p154 = pneg %p74
      %p155 = pneg %p103
      %p156 = pneg %p100
      %s157 = smul.u32 2, %s14
      %p158 = scmp.lt.s32.totalorder %s157, 7
      %s159 = scalar_select %p158, %s157, 7
      %s160 = smul.addr %s159, 4
      %s161 = scalar_lea.vmem %s3, %s160
      %s162 = smul.u32 2, %s14
      %p163 = scmp.lt.s32.totalorder %s162, 7
      %s164 = scalar_select %p163, %s162, 7
      %s165 = smul.addr %s164, 8
      %s166 = scalar_lea.vmem %s0, %s165
      %s167 = smul.u32 2, %s14
      %s168 = smul.u32 2, %s14
      %p169 = scmp.lt.s32.totalorder %s168, 7
      %s170 = scalar_select %p169, %s168, 7
      %s171 = smul.addr %s170, 4
      %s172 = scalar_lea.vmem %s3, %s171
      %s173 = smul.u32 2, %s14
      %v174 = vld [vmem:[%s166] sm:$0xff]
      %v175 = vld [vmem:[%s166 + $0x8] sm:$0xff]
      %v176 = vld [vmem:[%s1] sm:$0xff]
      %178 = vset.pattern.permute.xlu0 0
      %179 = vperm.xlu0 %178, %v176
      %v180 = vpop.permute.xlu0 %179
      %v182 = vmul.f32 %v174, %v180
      %v183 = vmul.f32 %v175, %v180
      %v184 = vld [vmem:[%s2] sm:$0xff]
      %186 = vset.pattern.permute.xlu0 0
      %187 = vperm.xlu0 %186, %v184
      %v188 = vpop.permute.xlu0 %187
      %v190 = vadd.f32 %v182, %v188
      %v191 = vadd.f32 %v183, %v188
      %vm192 = vcmp.gt.f32.partialorder %v190, 0.0
      %vm193 = vcmp.gt.f32.partialorder %v191, 0.0
      %v194 = vmul.f32 %v190, 0.2
      %v195 = vmul.f32 %v191, 0.2
      %v196 = vsel %vm192, %v190, %v194
      %v197 = vsel %vm193, %v191, %v195
      %v198 = vpack.c.bf16 %v196, %v196
      %v199 = vpack.c.bf16 %v197, %v197
      %v202 = vunpack.c.l.b16 %v198
      %v203 = vunpack.c.l.b16 %v199
      %v204 = vpack.c.b16 %v203, %v202
      %206 = vst [vmem:[%s172] sm:$0xff] %v204
      %s207 = smul.u32 2, %s14
      %p208 = scmp.lt.s32.totalorder %s207, 7
      %s209 = scalar_select %p208, %s207, 7
      %s210 = smul.addr %s209, 4
      %s211 = scalar_lea.vmem %s3, %s210
      // Predicated region
      $region33: #{down_transition_forward.9} parent=31 // pred_check
        %p212 = pneg %p100
      $region34: #{down_transition_forward.9} parent=31 // pred_check_branch
        %214 = sbr.rel (%p212) target = $region36
      $region35: #{down_transition_forward.9} parent=31 // pred_region
        %s215 = smul.u32 2, %s14
      $region36: #{down_transition_forward.9} parent=31 // pred_fallthru
        _
    $region32: #{down_transition_forward.9} parent=5 // pred_fallthru
      _
    %p216 = scmp.le.s32.totalorder 2, %s9
    // Predicated region
    $region37: #{down_transition_forward.9} parent=5 // pred_check
      %p217 = pneg %p216
    $region38: #{down_transition_forward.9} parent=5 // pred_check_branch
      %219 = sbr.rel (%p217) target = $region40
    $region39: #{down_transition_forward.9} parent=5 // pred_region
      %s220 = ssub.s32 %s9, 2
      // Predicated region
      $region41: #{down_transition_forward.9} parent=39 // pred_check
        %p221 = pneg %p106
      $region42: #{down_transition_forward.9} parent=39 // pred_check_branch
        %223 = sbr.rel (%p221) target = $region44
      $region43: #{down_transition_forward.9} parent=39 // pred_region
        %s224 = smul.u32 2, %s15
        %p225 = scmp.lt.s32.totalorder %s224, 7
        %s226 = scalar_select %p225, %s224, 7
        %s227 = smul.addr %s226, 4
        %s228 = scalar_lea.vmem %s3, %s227
      $region44: #{down_transition_forward.9} parent=39 // pred_fallthru
        _
    $region40: #{down_transition_forward.9} parent=5 // pred_fallthru
      _
  $region6: #{down_transition_forward.9} parent=0 // loop_footer
    %s13 = sadd.s32 1, %s9
  $region7: #{down_transition_forward.9} parent=0 // loop_footer_branch
    %8 = sbr.rel target = $region3
  $region8: #{down_transition_forward.9} parent=0 // loop_exit
    _

// kernel: down_transition_forward.11
$region0: #{down_transition_forward.11}
  #allocation0 [shape = 'u32[]', space=smem, size = 0x4, offset = 0x4, fixed_abs, tag = 'smem constant byte address 0x4 - core index']
  #allocation1 [shape = 'u32[144,128]{1,0:T(1,128)}', space=vmem, size = 0x12000, scoped, tag = 'internal scratch']
  %s0 = inlined_call_operand.vmem [shape: f32[8,1024], index: 0, kind: input, shape index: {}]
  %s1 = inlined_call_operand.vmem [shape: f32[8,1], index: 1, kind: input, shape index: {}]
  %s2 = inlined_call_operand.vmem [shape: f32[8,1], index: 2, kind: input, shape index: {}]
  %s3 = inlined_call_operand.vmem [shape: bf16[8,1024], index: 3, kind: input, shape index: {}]
  %s4 = inlined_call_operand.vmem [shape: f32[8,1024], index: 4, kind: output, shape index: {}]
  %s5 = sld [smem:[#allocation0]]
  $region49: #{down_transition_forward.11} parent=0
    _
  %s7 = ssub.s32 1, %s5
  %s8 = scalar_select 0, %s7, %s5
  loop: start=0, step=1, limit=6
  $region2: #{down_transition_forward.11} parent=0 // loop_pre_header
    _
  $region3: #{down_transition_forward.11} parent=0 // loop_header
    %s10 = sphi 0, %s14
    %p11 = scmp.ge.s32.totalorder %s10, 6
    %s20 = sphi 0, %s22
    %s23 = sphi 0, %s20
    %s24 = sphi 0, %s23
    %s40 = sphi 0, %s24
    %s44 = sphi 0, %s44
    %s46 = sphi 0, %s44
    %s47 = sphi 0, %s46
    %s61 = sphi 0, %s47
    %s65 = sphi 0, %s65
    %s67 = sphi 0, %s65
    %s68 = sphi 0, %s67
    %s82 = sphi 0, %s68
    %s88 = sphi 0, %s90
    %s91 = sphi 0, %s88
    %s92 = sphi 0, %s91
    %s108 = sphi 0, %s92
    %s114 = sphi 0, %s116
    %s117 = sphi 0, %s114
    %s118 = sphi 0, %s117
    %s134 = sphi 0, %s118
  $region4: #{down_transition_forward.11} parent=0 // loop_header_branch
    %13 = sbr.rel (%p11) target = $region8
  $region5: #{down_transition_forward.11} parent=0 // loop_body
    %s15 = ssub.s32 %s10, 1
    %s16 = ssub.s32 %s10, 2
    %s17 = sadd.s32 %s10, 1
    %s18 = ssub.s32 %s10, %s17
    %p19 = scmp.eq.s32.totalorder %s18, 0
    %s21 = sadd.s32 %s20, 1
    %s22 = scalar_select %p19, %s20, %s21
    %p25 = pneg %p19
    %p26 = scmp.eq.s32.totalorder %s10, 3
    %p27 = por %p25, %p26
    %p28 = scmp.ne.s32.totalorder %s20, %s23
    %p29 = scmp.eq.s32.totalorder %s10, 0
    %p30 = por %p28, %p29
    %p31 = scmp.ne.s32.totalorder %s20, %s23
    %p32 = scmp.eq.s32.totalorder %s15, 3
    %p33 = por %p31, %p32
    %p34 = scmp.ne.s32.totalorder %s23, %s24
    %p35 = scmp.eq.s32.totalorder %s15, 0
    %p36 = por %p34, %p35
    %p37 = scmp.ne.s32.totalorder %s23, %s24
    %p38 = scmp.eq.s32.totalorder %s16, 3
    %p39 = por %p37, %p38
    %p41 = scmp.ne.s32.totalorder %s24, %s40
    %p42 = scmp.eq.s32.totalorder %s16, 0
    %p43 = por %p41, %p42
    %s45 = sadd.s32 %s44, 1
    %p48 = scmp.eq.s32.totalorder %s10, 3
    %p49 = scmp.ne.s32.totalorder %s44, %s46
    %p50 = scmp.eq.s32.totalorder %s10, 0
    %p51 = por %p49, %p50
    %p52 = scmp.ne.s32.totalorder %s44, %s46
    %p53 = scmp.eq.s32.totalorder %s15, 3
    %p54 = por %p52, %p53
    %p55 = scmp.ne.s32.totalorder %s46, %s47
    %p56 = scmp.eq.s32.totalorder %s15, 0
    %p57 = por %p55, %p56
    %p58 = scmp.ne.s32.totalorder %s46, %s47
    %p59 = scmp.eq.s32.totalorder %s16, 3
    %p60 = por %p58, %p59
    %p62 = scmp.ne.s32.totalorder %s47, %s61
    %p63 = scmp.eq.s32.totalorder %s16, 0
    %p64 = por %p62, %p63
    %s66 = sadd.s32 %s65, 1
    %p69 = scmp.eq.s32.totalorder %s10, 3
    %p70 = scmp.ne.s32.totalorder %s65, %s67
    %p71 = scmp.eq.s32.totalorder %s10, 0
    %p72 = por %p70, %p71
    %p73 = scmp.ne.s32.totalorder %s65, %s67
    %p74 = scmp.eq.s32.totalorder %s15, 3
    %p75 = por %p73, %p74
    %p76 = scmp.ne.s32.totalorder %s67, %s68
    %p77 = scmp.eq.s32.totalorder %s15, 0
    %p78 = por %p76, %p77
    %p79 = scmp.ne.s32.totalorder %s67, %s68
    %p80 = scmp.eq.s32.totalorder %s16, 3
    %p81 = por %p79, %p80
    %p83 = scmp.ne.s32.totalorder %s68, %s82
    %p84 = scmp.eq.s32.totalorder %s16, 0
    %p85 = por %p83, %p84
    %s86 = ssub.s32 %s10, %s17
    %p87 = scmp.eq.s32.totalorder %s86, 0
    %s89 = sadd.s32 %s88, 1
    %s90 = scalar_select %p87, %s88, %s89
    %p93 = pneg %p87
    %p94 = scmp.eq.s32.totalorder %s10, 3
    %p95 = por %p93, %p94
    %p96 = scmp.ne.s32.totalorder %s88, %s91
    %p97 = scmp.eq.s32.totalorder %s10, 0
    %p98 = por %p96, %p97
    %p99 = scmp.ne.s32.totalorder %s88, %s91
    %p100 = scmp.eq.s32.totalorder %s15, 3
    %p101 = por %p99, %p100
    %p102 = scmp.ne.s32.totalorder %s91, %s92
    %p103 = scmp.eq.s32.totalorder %s15, 0
    %p104 = por %p102, %p103
    %p105 = scmp.ne.s32.totalorder %s91, %s92
    %p106 = scmp.eq.s32.totalorder %s16, 3
    %p107 = por %p105, %p106
    %p109 = scmp.ne.s32.totalorder %s92, %s108
    %p110 = scmp.eq.s32.totalorder %s16, 0
    %p111 = por %p109, %p110
    %s112 = ssub.s32 %s10, %s17
    %p113 = scmp.eq.s32.totalorder %s112, 0
    %s115 = sadd.s32 %s114, 1
    %s116 = scalar_select %p113, %s114, %s115
    %p119 = pneg %p113
    %p120 = scmp.eq.s32.totalorder %s10, 3
    %p121 = por %p119, %p120
    %p122 = scmp.ne.s32.totalorder %s114, %s117
    %p123 = scmp.eq.s32.totalorder %s10, 0
    %p124 = por %p122, %p123
    %p125 = scmp.ne.s32.totalorder %s114, %s117
    %p126 = scmp.eq.s32.totalorder %s15, 3
    %p127 = por %p125, %p126
    %p128 = scmp.ne.s32.totalorder %s117, %s118
    %p129 = scmp.eq.s32.totalorder %s15, 0
    %p130 = por %p128, %p129
    %p131 = scmp.ne.s32.totalorder %s117, %s118
    %p132 = scmp.eq.s32.totalorder %s16, 3
    %p133 = por %p131, %p132
    %p135 = scmp.ne.s32.totalorder %s118, %s134
    %p136 = scmp.eq.s32.totalorder %s16, 0
    %p137 = por %p135, %p136
    %p138 = scmp.le.s32.totalorder 1, %s10
    %p139 = scmp.lt.s32.totalorder %s10, 5
    %p140 = pnand %p138, %p139
    %p141 = pneg %p140
    // Predicated region
    $region9: #{down_transition_forward.11} parent=5 // pred_check
      _
    $region10: #{down_transition_forward.11} parent=5 // pred_check_branch
      %143 = sbr.rel (%p140) target = $region12
    $region11: #{down_transition_forward.11} parent=5 // pred_region
      %s144 = ssub.s32 %s10, 1
      // Predicated region
      $region13: #{down_transition_forward.11} parent=11 // pred_check
        %p145 = pneg %p57
      $region14: #{down_transition_forward.11} parent=11 // pred_check_branch
        %147 = sbr.rel (%p145) target = $region16
      $region15: #{down_transition_forward.11} parent=11 // pred_region
        _
      $region16: #{down_transition_forward.11} parent=11 // pred_fallthru
        _
      // Predicated region
      $region17: #{down_transition_forward.11} parent=11 // pred_check
        %p148 = pneg %p78
      $region18: #{down_transition_forward.11} parent=11 // pred_check_branch
        %150 = sbr.rel (%p148) target = $region20
      $region19: #{down_transition_forward.11} parent=11 // pred_region
        _
      $region20: #{down_transition_forward.11} parent=11 // pred_fallthru
        _
    $region12: #{down_transition_forward.11} parent=5 // pred_fallthru
      _
    %p151 = scmp.lt.s32.totalorder %s10, 4
    // Predicated region
    $region21: #{down_transition_forward.11} parent=5 // pred_check
      %p152 = pneg %p151
    $region22: #{down_transition_forward.11} parent=5 // pred_check_branch
      %154 = sbr.rel (%p152) target = $region24
    $region23: #{down_transition_forward.11} parent=5 // pred_region
      // Predicated region
      $region25: #{down_transition_forward.11} parent=23 // pred_check
        %p155 = pneg %p30
      $region26: #{down_transition_forward.11} parent=23 // pred_check_branch
        %157 = sbr.rel (%p155) target = $region28
      $region27: #{down_transition_forward.11} parent=23 // pred_region
        %s158 = smul.u32 2, %s10
        %p159 = scmp.lt.s32.totalorder %s158, 7
        %s160 = scalar_select %p159, %s158, 7
        %s161 = smul.addr %s160, 8
        %s162 = scalar_lea.vmem %s0, %s161
        %s163 = smul.u32 2, %s10
      $region28: #{down_transition_forward.11} parent=23 // pred_fallthru
        _
      // Predicated region
      $region29: #{down_transition_forward.11} parent=23 // pred_check
        %p164 = pneg %p98
      $region30: #{down_transition_forward.11} parent=23 // pred_check_branch
        %166 = sbr.rel (%p164) target = $region32
      $region31: #{down_transition_forward.11} parent=23 // pred_region
        %s167 = smul.u32 2, %s10
        %p168 = scmp.lt.s32.totalorder %s167, 7
        %s169 = scalar_select %p168, %s167, 7
        %s170 = smul.addr %s169, 4
        %s171 = scalar_lea.vmem %s3, %s170
        %s172 = smul.u32 2, %s10
      $region32: #{down_transition_forward.11} parent=23 // pred_fallthru
        _
    $region24: #{down_transition_forward.11} parent=5 // pred_fallthru
      _
    %p173 = scmp.le.s32.totalorder 1, %s10
    %p174 = scmp.lt.s32.totalorder %s10, 5
    %p175 = pnand %p173, %p174
    %p176 = pneg %p175
    // Predicated region
    $region33: #{down_transition_forward.11} parent=5 // pred_check
      _
    $region34: #{down_transition_forward.11} parent=5 // pred_check_branch
      %178 = sbr.rel (%p175) target = $region36
    $region35: #{down_transition_forward.11} parent=5 // pred_region
      %s179 = ssub.s32 %s10, 1
      %s180 = smul.u32 2, %s15
      %p181 = scmp.lt.s32.totalorder %s180, 7
      %s182 = scalar_select %p181, %s180, 7
      %s183 = smul.addr %s182, 8
      %s184 = scalar_lea.vmem %s0, %s183
      %p185 = pneg %p36
      %p186 = pneg %p33
      %p187 = pneg %p57
      %p188 = pneg %p54
      %p189 = pneg %p78
      %p190 = pneg %p75
      %s191 = smul.u32 2, %s15
      %p192 = scmp.lt.s32.totalorder %s191, 7
      %s193 = scalar_select %p192, %s191, 7
      %s194 = smul.addr %s193, 4
      %s195 = scalar_lea.vmem %s3, %s194
      %p196 = pneg %p104
      %p197 = pneg %p101
      %p198 = pneg %p130
      %p199 = pneg %p127
      %s200 = smul.u32 2, %s15
      %p201 = scmp.lt.s32.totalorder %s200, 7
      %s202 = scalar_select %p201, %s200, 7
      %s203 = smul.addr %s202, 8
      %s204 = scalar_lea.vmem %s4, %s203
      %s205 = smul.u32 2, %s15
      %p206 = scmp.lt.s32.totalorder %s205, 7
      %s207 = scalar_select %p206, %s205, 7
      %s208 = smul.addr %s207, 8
      %s209 = scalar_lea.vmem %s0, %s208
      %s210 = smul.u32 2, %s15
      %s211 = smul.u32 2, %s15
      %p212 = scmp.lt.s32.totalorder %s211, 7
      %s213 = scalar_select %p212, %s211, 7
      %s214 = smul.addr %s213, 4
      %s215 = scalar_lea.vmem %s3, %s214
      %s216 = smul.u32 2, %s15
      %s217 = smul.u32 2, %s15
      %p218 = scmp.lt.s32.totalorder %s217, 7
      %s219 = scalar_select %p218, %s217, 7
      %s220 = smul.addr %s219, 8
      %s221 = scalar_lea.vmem %s4, %s220
      %s222 = smul.u32 2, %s15
      %v223 = vld [vmem:[%s209] sm:$0xff]
      %v224 = vld [vmem:[%s209 + $0x8] sm:$0xff]
      %v225 = vld [vmem:[%s1] sm:$0xff]
      %227 = vset.pattern.permute.xlu0 0
      %228 = vperm.xlu0 %227, %v225
      %v229 = vpop.permute.xlu0 %228
      %v231 = vmul.f32 %v223, %v229
      %v232 = vmul.f32 %v224, %v229
      %v233 = vld [vmem:[%s2] sm:$0xff]
      %235 = vset.pattern.permute.xlu0 0
      %236 = vperm.xlu0 %235, %v233
      %v237 = vpop.permute.xlu0 %236
      %v239 = vadd.f32 %v231, %v237
      %v240 = vadd.f32 %v232, %v237
      %v241 = vld [vmem:[%s215] sm:$0xff]
      %v242 = vunpack.c.l.bf16 %v241
      %v243 = vunpack.c.h.bf16 %v241
      %v244 = vadd.f32 %v239, %v242
      %v245 = vadd.f32 %v240, %v243
      %vm246 = vcmp.gt.f32.partialorder %v244, 0.0
      %vm247 = vcmp.gt.f32.partialorder %v245, 0.0
      %v248 = vmul.f32 %v244, 0.2
      %v249 = vmul.f32 %v245, 0.2
      %v250 = vsel %vm246, %v244, %v248
      %v251 = vsel %vm247, %v245, %v249
      %252 = vst [vmem:[%s221] sm:$0xff] %v250
      %253 = vst [vmem:[%s221 + $0x8] sm:$0xff] %v251
      %s254 = smul.u32 2, %s15
      %p255 = scmp.lt.s32.totalorder %s254, 7
      %s256 = scalar_select %p255, %s254, 7
      %s257 = smul.addr %s256, 8
      %s258 = scalar_lea.vmem %s4, %s257
      // Predicated region
      $region37: #{down_transition_forward.11} parent=35 // pred_check
        %p259 = pneg %p127
      $region38: #{down_transition_forward.11} parent=35 // pred_check_branch
        %261 = sbr.rel (%p259) target = $region40
      $region39: #{down_transition_forward.11} parent=35 // pred_region
        %s262 = smul.u32 2, %s15
      $region40: #{down_transition_forward.11} parent=35 // pred_fallthru
        _
    $region36: #{down_transition_forward.11} parent=5 // pred_fallthru
      _
    %p263 = scmp.le.s32.totalorder 2, %s10
    // Predicated region
    $region41: #{down_transition_forward.11} parent=5 // pred_check
      %p264 = pneg %p263
    $region42: #{down_transition_forward.11} parent=5 // pred_check_branch
      %266 = sbr.rel (%p264) target = $region44
    $region43: #{down_transition_forward.11} parent=5 // pred_region
      %s267 = ssub.s32 %s10, 2
      // Predicated region
      $region45: #{down_transition_forward.11} parent=43 // pred_check
        %p268 = pneg %p133
      $region46: #{down_transition_forward.11} parent=43 // pred_check_branch
        %270 = sbr.rel (%p268) target = $region48
      $region47: #{down_transition_forward.11} parent=43 // pred_region
        %s271 = smul.u32 2, %s16
        %p272 = scmp.lt.s32.totalorder %s271, 7
        %s273 = scalar_select %p272, %s271, 7
        %s274 = smul.addr %s273, 8
        %s275 = scalar_lea.vmem %s4, %s274
      $region48: #{down_transition_forward.11} parent=43 // pred_fallthru
        _
    $region44: #{down_transition_forward.11} parent=5 // pred_fallthru
      _
  $region6: #{down_transition_forward.11} parent=0 // loop_footer
    %s14 = sadd.s32 1, %s10
  $region7: #{down_transition_forward.11} parent=0 // loop_footer_branch
    %9 = sbr.rel target = $region3
  $region8: #{down_transition_forward.11} parent=0 // loop_exit
    _

</llo_original>
